<compile_context>
chip_gen: v6e
topology: v6e:2x2x1
jax: 0.10.0
libtpu: 0.0.40
codegen_flags: <defaults>
</compile_context>

<pallas_src>
import functools
import math

import jax
import jax.numpy as jnp
from jax import lax
from jax.experimental import pallas as pl
from jax.experimental.pallas import tpu as pltpu


# ----------------------------------------------------------------------------
# Kernel 1: tiled fused linear  o = x @ wt (+ bias) (+ residual)
#           wt is pre-transposed to [in, out]; K is the innermost grid axis.
# ----------------------------------------------------------------------------
def _linear_kernel(*refs, has_bias, has_res):
    x_ref, w_ref = refs[0], refs[1]
    idx = 2
    b_ref = refs[idx] if has_bias else None
    if has_bias:
        idx += 1
    r_ref = refs[idx] if has_res else None
    if has_res:
        idx += 1
    o_ref = refs[idx]
    acc_ref = refs[idx + 1]

    k = pl.program_id(2)

    @pl.when(k == 0)
    def _():
        acc_ref[...] = jnp.zeros_like(acc_ref)

    acc_ref[...] += jnp.dot(x_ref[...], w_ref[...],
                            preferred_element_type=jnp.float32)

    @pl.when(k == pl.num_programs(2) - 1)
    def _():
        out = acc_ref[...]
        if has_bias:
            out = out + b_ref[...]
        if has_res:
            out = out + r_ref[...]
        o_ref[...] = out.astype(o_ref.dtype)     # single lane-dense store


def _pick_tile(dim, candidates):
    """Largest candidate tile that evenly divides `dim`, else the full dim."""
    for c in candidates:
        if dim >= c and dim % c == 0:
            return c
    return dim


def linear(x2d, wt, b=None, residual=None):
    """y = x2d @ wt (+ b) (+ residual).  wt is [in, out] (already transposed)."""
    M, K = x2d.shape
    K2, N = wt.shape
    assert K == K2
    # 256-aligned preferences (v6e/v7x MXU is 2x256x256); falls back to full
    # dims for small shapes so the (8,128) block constraint is always met.
    tm = _pick_tile(M, (256, 128))
    tn = _pick_tile(N, (512, 256, 128))
    tk = _pick_tile(K, (512, 256, 128))
    grid = (M // tm, N // tn, K // tk)

    in_specs = [
        pl.BlockSpec((tm, tk), lambda i, j, k: (i, k)),
        pl.BlockSpec((tk, tn), lambda i, j, k: (k, j)),
    ]
    args = [x2d, wt]
    if b is not None:
        in_specs.append(pl.BlockSpec((1, tn), lambda i, j, k: (0, j)))
        args.append(b.reshape(1, N))
    if residual is not None:
        in_specs.append(pl.BlockSpec((tm, tn), lambda i, j, k: (i, j)))
        args.append(residual)

    kern = functools.partial(_linear_kernel,
                             has_bias=b is not None,
                             has_res=residual is not None)
    return pl.pallas_call(
        kern,
        out_shape=jax.ShapeDtypeStruct((M, N), x2d.dtype),
        grid=grid,
        in_specs=in_specs,
        out_specs=pl.BlockSpec((tm, tn), lambda i, j, k: (i, j)),
        scratch_shapes=[pltpu.VMEM((tm, tn), jnp.float32)],
        compiler_params=pltpu.CompilerParams(
            dimension_semantics=("parallel", "parallel", "arbitrary")),
    )(*args)


# ----------------------------------------------------------------------------
# Kernel 2: multi-head attention, one batch per grid step.
#           q/k/v/o blocks are full [S, C] slabs (heads packed along lanes),
#           so loads/stores stay lane-dense and no HBM transposes are needed.
#           The 1/sqrt(Dh) scale is already folded into the q projection.
# ----------------------------------------------------------------------------
def _mha_kernel(q_ref, k_ref, v_ref, o_ref, *, num_heads, head_dim):
    q = q_ref[0]                                 # [S, C] f32
    k = k_ref[0]
    v = v_ref[0]
    outs = []
    for h in range(num_heads):                   # static, small head count
        lo = h * head_dim
        hi = lo + head_dim
        qh, kh, vh = q[:, lo:hi], k[:, lo:hi], v[:, lo:hi]     # [S, Dh]
        # scores = qh @ kh^T without materializing a transpose
        s = lax.dot_general(qh, kh, (((1,), (1,)), ((), ())),
                            preferred_element_type=jnp.float32)  # [S, S]
        s = s - jnp.max(s, axis=-1, keepdims=True)
        p = jnp.exp(s)
        denom = jnp.sum(p, axis=-1, keepdims=True)
        p = p * pl.reciprocal(denom, approx=True)   # EUP slot, not VALU divide
        outs.append(jnp.dot(p, vh, preferred_element_type=jnp.float32))
    # one lane-dense store of all heads
    o_ref[0] = jnp.concatenate(outs, axis=-1).astype(o_ref.dtype)


def multihead_attention(q, k, v, *, num_heads):
    """q/k/v: [B, S, C] -> attention output [B, S, C]."""
    B, S, C = q.shape
    head_dim = C // num_heads
    kern = functools.partial(_mha_kernel, num_heads=num_heads, head_dim=head_dim)
    spec = pl.BlockSpec((1, S, C), lambda b: (b, 0, 0))
    return pl.pallas_call(
        kern,
        out_shape=jax.ShapeDtypeStruct((B, S, C), q.dtype),
        grid=(B,),
        in_specs=[spec, spec, spec],
        out_specs=spec,
        compiler_params=pltpu.CompilerParams(
            dimension_semantics=("parallel",)),
    )(q, k, v)
    # TODO(synk): the averaged attention-weight matrix (torch ma(...)[1]) is
    # unused by the module's forward and is not computed here.


# ----------------------------------------------------------------------------
# Parameter folding (done once, outside the jitted forward)
# ----------------------------------------------------------------------------
def fold_params(p, num_heads):
    """Compose outer q/k/v with MHA in_proj, fold the 1/sqrt(Dh) scale, and
    pre-transpose every weight to [in, out] so kernels are pure MXU dots."""
    c = p["wq"].shape[0]
    dh = c // num_heads
    scale = 1.0 / math.sqrt(dh)
    wq_eff = scale * (p["w_iq"] @ p["wq"])       # [out, in]
    wk_eff = p["w_ik"] @ p["wk"]
    wv_eff = p["w_iv"] @ p["wv"]
    bq_eff = scale * p["b_iq"]
    return {
        "w_qkv_t": jnp.concatenate([wq_eff.T, wk_eff.T, wv_eff.T], axis=1),  # [c, 3c]
        "b_qkv": jnp.concatenate([bq_eff, p["b_ik"], p["b_iv"]]),            # [3c]
        "w_out_t": p["w_out"].T,
        "b_out": p["b_out"],
        "w_fc1_t": p["w_fc1"].T,
        "w_fc2_t": p["w_fc2"].T,
    }


# ----------------------------------------------------------------------------
# TransformerLayer forward (x is [S, B, C], like torch batch_first=False)
# ----------------------------------------------------------------------------
def transformer_layer(x, fp, num_heads):
    S, B, C = x.shape
    # Batch-first layout: a single cheap transpose in (and one out at the end)
    # replaces the four HBM transposes previously done around attention.
    xb = jnp.transpose(x, (1, 0, 2))             # [B, S, C]
    x2d = xb.reshape(B * S, C)

    # Fused (outer q/k/v ∘ in_proj) projection: one matmul -> [B*S, 3C]
    qkv = linear(x2d, fp["w_qkv_t"], fp["b_qkv"])
    q = qkv[:, :C].reshape(B, S, C)              # free reshapes
    k = qkv[:, C:2 * C].reshape(B, S, C)
    v = qkv[:, 2 * C:].reshape(B, S, C)

    attn = multihead_attention(q, k, v, num_heads=num_heads)   # [B, S, C]
    attn2d = attn.reshape(B * S, C)

    # out_proj (bias) + residual
    x2d = linear(attn2d, fp["w_out_t"], fp["b_out"], residual=x2d)

    # feed-forward: fc2(fc1(x)) + x   (both bias=False)
    h = linear(x2d, fp["w_fc1_t"])
    y2d = linear(h, fp["w_fc2_t"], residual=x2d)

    return jnp.transpose(y2d.reshape(B, S, C), (1, 0, 2))      # [S, B, C]


# ----------------------------------------------------------------------------
# Synthetic parameters (torch layout: weights [out, in]) and pure-JAX reference
# ----------------------------------------------------------------------------
def init_params(key, c):
    ks = jax.random.split(key, 13)
    lim = 1.0 / math.sqrt(c)
    u = lambda k, shape: jax.random.uniform(k, shape, jnp.float32, -lim, lim)
    return {
        "wq": u(ks[0], (c, c)), "wk": u(ks[1], (c, c)), "wv": u(ks[2], (c, c)),
        "w_iq": u(ks[3], (c, c)), "w_ik": u(ks[4], (c, c)), "w_iv": u(ks[5], (c, c)),
        "b_iq": u(ks[6], (c,)), "b_ik": u(ks[7], (c,)), "b_iv": u(ks[8], (c,)),
        "w_out": u(ks[9], (c, c)), "b_out": u(ks[10], (c,)),
        "w_fc1": u(ks[11], (c, c)), "w_fc2": u(ks[12], (c, c)),
    }


def reference_forward(x, p, num_heads):
    """Pure-JAX reference that mirrors the torch module op-for-op."""
    S, B, C = x.shape
    dh = C // num_heads
    with jax.default_matmul_precision("highest"):
        x2d = x.reshape(S * B, C)
        xq = x2d @ p["wq"].T
        xk = x2d @ p["wk"].T
        xv = x2d @ p["wv"].T
        q = xq @ p["w_iq"].T + p["b_iq"]
        k = xk @ p["w_ik"].T + p["b_ik"]
        v = xv @ p["w_iv"].T + p["b_iv"]

        def split(t):   # [S*B, C] -> [B, H, S, Dh]
            return t.reshape(S, B, num_heads, dh).transpose(1, 2, 0, 3)

        qh, kh, vh = split(q), split(k), split(v)
        s = jnp.einsum("bhqd,bhkd->bhqk", qh * (1.0 / math.sqrt(dh)), kh)
        pw = jax.nn.softmax(s, axis=-1)
        o = jnp.einsum("bhqk,bhkd->bhqd", pw, vh)
        o2d = o.transpose(2, 0, 1, 3).reshape(S * B, C)
        x2d = o2d @ p["w_out"].T + p["b_out"] + x2d
        y = (x2d @ p["w_fc1"].T) @ p["w_fc2"].T + x2d
        return y.reshape(S, B, C)


if __name__ == "__main__":
    S, B, C, NUM_HEADS = 8, 2, 32, 4
    key = jax.random.PRNGKey(0)
    kx, kp = jax.random.split(key)
    x = jax.random.normal(kx, (S, B, C), jnp.float32)   # [seq, batch, channels]
    params = init_params(kp, C)
    folded = fold_params(params, NUM_HEADS)

    fwd = jax.jit(functools.partial(transformer_layer, num_heads=NUM_HEADS))
    y = fwd(x, folded)
    jax.block_until_ready(y)

    assert y.shape == (S, B, C) and y.dtype == jnp.float32
    assert bool(jnp.all(jnp.isfinite(y)))
    y_ref = reference_forward(x, params, NUM_HEADS)
    err = float(jnp.max(jnp.abs(y - y_ref)))
    assert err < 5e-2, f"max abs err vs reference: {err}"
    print("KERNEL_OK")
</pallas_src>

<mosaic_0001>
module attributes {stable_mosaic.version = 11 : i64} {
  func.func @_mha_kernel(%arg0: i32, %arg1: memref<1x8x32xf32, #tpu.memory_space<vmem>>, %arg2: memref<1x8x32xf32, #tpu.memory_space<vmem>>, %arg3: memref<1x8x32xf32, #tpu.memory_space<vmem>>, %arg4: memref<1x8x32xf32, #tpu.memory_space<vmem>>) attributes {dimension_semantics = [#tpu.dimension_semantics<parallel>], iteration_bounds = array<i64: 2>, scalar_prefetch = 0 : i64, scratch_operands = 0 : i64, tpu.core_type = #tpu.core_type<tc>, window_params = [{transform_indices = @transform_0, window_bounds = array<i64: 1, 8, 32>}, {transform_indices = @transform_1, window_bounds = array<i64: 1, 8, 32>}, {transform_indices = @transform_2, window_bounds = array<i64: 1, 8, 32>}, {transform_indices = @transform_3, window_bounds = array<i64: 1, 8, 32>}]} {
    %c0 = arith.constant 0 : index
    %c0_0 = arith.constant 0 : index
    %c0_1 = arith.constant 0 : index
    %0 = vector.load %arg1[%c0, %c0_0, %c0_1] : memref<1x8x32xf32, #tpu.memory_space<vmem>>, vector<1x8x32xf32>
    %1 = vector.shape_cast %0 : vector<1x8x32xf32> to vector<8x32xf32>
    %c0_2 = arith.constant 0 : index
    %c0_3 = arith.constant 0 : index
    %c0_4 = arith.constant 0 : index
    %2 = vector.load %arg2[%c0_2, %c0_3, %c0_4] : memref<1x8x32xf32, #tpu.memory_space<vmem>>, vector<1x8x32xf32>
    %3 = vector.shape_cast %2 : vector<1x8x32xf32> to vector<8x32xf32>
    %c0_5 = arith.constant 0 : index
    %c0_6 = arith.constant 0 : index
    %c0_7 = arith.constant 0 : index
    %4 = vector.load %arg3[%c0_5, %c0_6, %c0_7] : memref<1x8x32xf32, #tpu.memory_space<vmem>>, vector<1x8x32xf32>
    %5 = vector.shape_cast %4 : vector<1x8x32xf32> to vector<8x32xf32>
    %6 = vector.extract_strided_slice %1 {offsets = [0, 0], sizes = [8, 8], strides = [1, 1]} : vector<8x32xf32> to vector<8x8xf32>
    %7 = vector.extract_strided_slice %3 {offsets = [0, 0], sizes = [8, 8], strides = [1, 1]} : vector<8x32xf32> to vector<8x8xf32>
    %8 = vector.extract_strided_slice %5 {offsets = [0, 0], sizes = [8, 8], strides = [1, 1]} : vector<8x32xf32> to vector<8x8xf32>
    %cst = arith.constant dense<0.000000e+00> : vector<8x8xf32>
    %9 = tpu.matmul %6, %7, %cst {dimension_numbers = #tpu.dot_dimension_numbers<[1], [1], [0], [0], [0, 0, 1, 0], [], []>} : vector<8x8xf32>, vector<8x8xf32>, vector<8x8xf32> -> vector<8x8xf32>
    %cst_8 = arith.constant dense<0xFF800000> : vector<8xf32>
    %10 = vector.multi_reduction <maximumf>, %9, %cst_8 [1] : vector<8x8xf32> to vector<8xf32>
    %11 = vector.shape_cast %10 : vector<8xf32> to vector<8x1xf32>
    %12 = vector.broadcast %11 : vector<8x1xf32> to vector<8x8xf32>
    %13 = arith.subf %9, %12 : vector<8x8xf32>
    %14 = math.exp %13 : vector<8x8xf32>
    %cst_9 = arith.constant dense<0.000000e+00> : vector<8xf32>
    %15 = vector.multi_reduction <add>, %14, %cst_9 [1] : vector<8x8xf32> to vector<8xf32>
    %16 = vector.shape_cast %15 : vector<8xf32> to vector<8x1xf32>
    %17 = tpu.reciprocal %16 {approx = true} : vector<8x1xf32> -> vector<8x1xf32>
    %18 = vector.broadcast %17 : vector<8x1xf32> to vector<8x8xf32>
    %19 = arith.mulf %14, %18 : vector<8x8xf32>
    %cst_10 = arith.constant dense<0.000000e+00> : vector<8x8xf32>
    %20 = tpu.matmul %19, %8, %cst_10 {dimension_numbers = #tpu.dot_dimension_numbers<[1], [0], [0], [1], [0, 0, 1, 1], [], []>} : vector<8x8xf32>, vector<8x8xf32>, vector<8x8xf32> -> vector<8x8xf32>
    %21 = vector.extract_strided_slice %1 {offsets = [0, 8], sizes = [8, 8], strides = [1, 1]} : vector<8x32xf32> to vector<8x8xf32>
    %22 = vector.extract_strided_slice %3 {offsets = [0, 8], sizes = [8, 8], strides = [1, 1]} : vector<8x32xf32> to vector<8x8xf32>
    %23 = vector.extract_strided_slice %5 {offsets = [0, 8], sizes = [8, 8], strides = [1, 1]} : vector<8x32xf32> to vector<8x8xf32>
    %cst_11 = arith.constant dense<0.000000e+00> : vector<8x8xf32>
    %24 = tpu.matmul %21, %22, %cst_11 {dimension_numbers = #tpu.dot_dimension_numbers<[1], [1], [0], [0], [0, 0, 1, 0], [], []>} : vector<8x8xf32>, vector<8x8xf32>, vector<8x8xf32> -> vector<8x8xf32>
    %cst_12 = arith.constant dense<0xFF800000> : vector<8xf32>
    %25 = vector.multi_reduction <maximumf>, %24, %cst_12 [1] : vector<8x8xf32> to vector<8xf32>
    %26 = vector.shape_cast %25 : vector<8xf32> to vector<8x1xf32>
    %27 = vector.broadcast %26 : vector<8x1xf32> to vector<8x8xf32>
    %28 = arith.subf %24, %27 : vector<8x8xf32>
    %29 = math.exp %28 : vector<8x8xf32>
    %cst_13 = arith.constant dense<0.000000e+00> : vector<8xf32>
    %30 = vector.multi_reduction <add>, %29, %cst_13 [1] : vector<8x8xf32> to vector<8xf32>
    %31 = vector.shape_cast %30 : vector<8xf32> to vector<8x1xf32>
    %32 = tpu.reciprocal %31 {approx = true} : vector<8x1xf32> -> vector<8x1xf32>
    %33 = vector.broadcast %32 : vector<8x1xf32> to vector<8x8xf32>
    %34 = arith.mulf %29, %33 : vector<8x8xf32>
    %cst_14 = arith.constant dense<0.000000e+00> : vector<8x8xf32>
    %35 = tpu.matmul %34, %23, %cst_14 {dimension_numbers = #tpu.dot_dimension_numbers<[1], [0], [0], [1], [0, 0, 1, 1], [], []>} : vector<8x8xf32>, vector<8x8xf32>, vector<8x8xf32> -> vector<8x8xf32>
    %36 = vector.extract_strided_slice %1 {offsets = [0, 16], sizes = [8, 8], strides = [1, 1]} : vector<8x32xf32> to vector<8x8xf32>
    %37 = vector.extract_strided_slice %3 {offsets = [0, 16], sizes = [8, 8], strides = [1, 1]} : vector<8x32xf32> to vector<8x8xf32>
    %38 = vector.extract_strided_slice %5 {offsets = [0, 16], sizes = [8, 8], strides = [1, 1]} : vector<8x32xf32> to vector<8x8xf32>
    %cst_15 = arith.constant dense<0.000000e+00> : vector<8x8xf32>
    %39 = tpu.matmul %36, %37, %cst_15 {dimension_numbers = #tpu.dot_dimension_numbers<[1], [1], [0], [0], [0, 0, 1, 0], [], []>} : vector<8x8xf32>, vector<8x8xf32>, vector<8x8xf32> -> vector<8x8xf32>
    %cst_16 = arith.constant dense<0xFF800000> : vector<8xf32>
    %40 = vector.multi_reduction <maximumf>, %39, %cst_16 [1] : vector<8x8xf32> to vector<8xf32>
    %41 = vector.shape_cast %40 : vector<8xf32> to vector<8x1xf32>
    %42 = vector.broadcast %41 : vector<8x1xf32> to vector<8x8xf32>
    %43 = arith.subf %39, %42 : vector<8x8xf32>
    %44 = math.exp %43 : vector<8x8xf32>
    %cst_17 = arith.constant dense<0.000000e+00> : vector<8xf32>
    %45 = vector.multi_reduction <add>, %44, %cst_17 [1] : vector<8x8xf32> to vector<8xf32>
    %46 = vector.shape_cast %45 : vector<8xf32> to vector<8x1xf32>
    %47 = tpu.reciprocal %46 {approx = true} : vector<8x1xf32> -> vector<8x1xf32>
    %48 = vector.broadcast %47 : vector<8x1xf32> to vector<8x8xf32>
    %49 = arith.mulf %44, %48 : vector<8x8xf32>
    %cst_18 = arith.constant dense<0.000000e+00> : vector<8x8xf32>
    %50 = tpu.matmul %49, %38, %cst_18 {dimension_numbers = #tpu.dot_dimension_numbers<[1], [0], [0], [1], [0, 0, 1, 1], [], []>} : vector<8x8xf32>, vector<8x8xf32>, vector<8x8xf32> -> vector<8x8xf32>
    %51 = vector.extract_strided_slice %1 {offsets = [0, 24], sizes = [8, 8], strides = [1, 1]} : vector<8x32xf32> to vector<8x8xf32>
    %52 = vector.extract_strided_slice %3 {offsets = [0, 24], sizes = [8, 8], strides = [1, 1]} : vector<8x32xf32> to vector<8x8xf32>
    %53 = vector.extract_strided_slice %5 {offsets = [0, 24], sizes = [8, 8], strides = [1, 1]} : vector<8x32xf32> to vector<8x8xf32>
    %cst_19 = arith.constant dense<0.000000e+00> : vector<8x8xf32>
    %54 = tpu.matmul %51, %52, %cst_19 {dimension_numbers = #tpu.dot_dimension_numbers<[1], [1], [0], [0], [0, 0, 1, 0], [], []>} : vector<8x8xf32>, vector<8x8xf32>, vector<8x8xf32> -> vector<8x8xf32>
    %cst_20 = arith.constant dense<0xFF800000> : vector<8xf32>
    %55 = vector.multi_reduction <maximumf>, %54, %cst_20 [1] : vector<8x8xf32> to vector<8xf32>
    %56 = vector.shape_cast %55 : vector<8xf32> to vector<8x1xf32>
    %57 = vector.broadcast %56 : vector<8x1xf32> to vector<8x8xf32>
    %58 = arith.subf %54, %57 : vector<8x8xf32>
    %59 = math.exp %58 : vector<8x8xf32>
    %cst_21 = arith.constant dense<0.000000e+00> : vector<8xf32>
    %60 = vector.multi_reduction <add>, %59, %cst_21 [1] : vector<8x8xf32> to vector<8xf32>
    %61 = vector.shape_cast %60 : vector<8xf32> to vector<8x1xf32>
    %62 = tpu.reciprocal %61 {approx = true} : vector<8x1xf32> -> vector<8x1xf32>
    %63 = vector.broadcast %62 : vector<8x1xf32> to vector<8x8xf32>
    %64 = arith.mulf %59, %63 : vector<8x8xf32>
    %cst_22 = arith.constant dense<0.000000e+00> : vector<8x8xf32>
    %65 = tpu.matmul %64, %53, %cst_22 {dimension_numbers = #tpu.dot_dimension_numbers<[1], [0], [0], [1], [0, 0, 1, 1], [], []>} : vector<8x8xf32>, vector<8x8xf32>, vector<8x8xf32> -> vector<8x8xf32>
    %66 = tpu.concatenate %20, %35, %50, %65 in 1 : vector<8x8xf32>, vector<8x8xf32>, vector<8x8xf32>, vector<8x8xf32> -> vector<8x32xf32>
    %c0_23 = arith.constant 0 : index
    %c0_24 = arith.constant 0 : index
    %c0_25 = arith.constant 0 : index
    %67 = vector.load %arg4[%c0_23, %c0_24, %c0_25] : memref<1x8x32xf32, #tpu.memory_space<vmem>>, vector<1x8x32xf32>
    %68 = vector.shape_cast %67 : vector<1x8x32xf32> to vector<8x32xf32>
    %69 = vector.shape_cast %66 : vector<8x32xf32> to vector<1x8x32xf32>
    tpu.vector_store %arg4[%c0_23, %c0_24, %c0_25], %69 {strides = array<i32>} : memref<1x8x32xf32, #tpu.memory_space<vmem>>, vector<1x8x32xf32>,
    return
  }
  func.func @transform_0(%arg0: i32) -> (i32, i32, i32) {
    %c0_i32 = arith.constant 0 : i32
    %c0_i32_0 = arith.constant 0 : i32
    %c0_i32_1 = arith.constant 0 : i32
    return %arg0, %c0_i32, %c0_i32_0 : i32, i32, i32
  }
  func.func @transform_1(%arg0: i32) -> (i32, i32, i32) {
    %c0_i32 = arith.constant 0 : i32
    %c0_i32_0 = arith.constant 0 : i32
    %c0_i32_1 = arith.constant 0 : i32
    return %arg0, %c0_i32, %c0_i32_0 : i32, i32, i32
  }
  func.func @transform_2(%arg0: i32) -> (i32, i32, i32) {
    %c0_i32 = arith.constant 0 : i32
    %c0_i32_0 = arith.constant 0 : i32
    %c0_i32_1 = arith.constant 0 : i32
    return %arg0, %c0_i32, %c0_i32_0 : i32, i32, i32
  }
  func.func @transform_3(%arg0: i32) -> (i32, i32, i32) {
    %c0_i32 = arith.constant 0 : i32
    %c0_i32_0 = arith.constant 0 : i32
    %c0_i32_1 = arith.constant 0 : i32
    return %arg0, %c0_i32, %c0_i32_0 : i32, i32, i32
  }
}

module attributes {stable_mosaic.version = 11 : i64} {
  func.func @_linear_kernel(%arg0: i32, %arg1: i32, %arg2: i32, %arg3: memref<16x32xf32, #tpu.memory_space<vmem>>, %arg4: memref<32x96xf32, #tpu.memory_space<vmem>>, %arg5: memref<1x96xf32, #tpu.memory_space<vmem>>, %arg6: memref<16x96xf32, #tpu.memory_space<vmem>>, %arg7: memref<16x96xf32, #tpu.memory_space<vmem>>) attributes {dimension_semantics = [#tpu.dimension_semantics<parallel>, #tpu.dimension_semantics<parallel>, #tpu.dimension_semantics<arbitrary>], iteration_bounds = array<i64: 1, 1, 1>, scalar_prefetch = 0 : i64, scratch_operands = 1 : i64, tpu.core_type = #tpu.core_type<tc>, window_params = [{transform_indices = @transform_0, window_bounds = array<i64: 16, 32>}, {transform_indices = @transform_1, window_bounds = array<i64: 32, 96>}, {transform_indices = @transform_2, window_bounds = array<i64: 1, 96>}, {transform_indices = @transform_3, window_bounds = array<i64: 16, 96>}]} {
    %c0_i32 = arith.constant 0 : i32
    %0 = arith.cmpi eq, %arg2, %c0_i32 : i32
    %1 = arith.extui %0 : i1 to i32
    %c0_i32_0 = arith.constant 0 : i32
    %2 = arith.cmpi ne, %1, %c0_i32_0 : i32
    scf.if %2 {
      %cst_10 = arith.constant 0.000000e+00 : f32
      %12 = vector.broadcast %cst_10 : f32 to vector<16x96xf32>
      %c0_11 = arith.constant 0 : index
      %c0_12 = arith.constant 0 : index
      %13 = vector.load %arg7[%c0_11, %c0_12] : memref<16x96xf32, #tpu.memory_space<vmem>>, vector<16x96xf32>
      tpu.vector_store %arg7[%c0_11, %c0_12], %12 {strides = array<i32>} : memref<16x96xf32, #tpu.memory_space<vmem>>, vector<16x96xf32>,
    } else {
    }
    %c0 = arith.constant 0 : index
    %c0_1 = arith.constant 0 : index
    %3 = vector.load %arg7[%c0, %c0_1] : memref<16x96xf32, #tpu.memory_space<vmem>>, vector<16x96xf32>
    %c0_2 = arith.constant 0 : index
    %c0_3 = arith.constant 0 : index
    %4 = vector.load %arg3[%c0_2, %c0_3] : memref<16x32xf32, #tpu.memory_space<vmem>>, vector<16x32xf32>
    %c0_4 = arith.constant 0 : index
    %c0_5 = arith.constant 0 : index
    %5 = vector.load %arg4[%c0_4, %c0_5] : memref<32x96xf32, #tpu.memory_space<vmem>>, vector<32x96xf32>
    %cst = arith.constant dense<0.000000e+00> : vector<16x96xf32>
    %6 = tpu.matmul %4, %5, %cst {dimension_numbers = #tpu.dot_dimension_numbers<[1], [0], [0], [1], [0, 0, 1, 1], [], []>} : vector<16x32xf32>, vector<32x96xf32>, vector<16x96xf32> -> vector<16x96xf32>
    %7 = arith.addf %3, %6 : vector<16x96xf32>
    %c0_6 = arith.constant 0 : index
    %c0_7 = arith.constant 0 : index
    %8 = vector.load %arg7[%c0_6, %c0_7] : memref<16x96xf32, #tpu.memory_space<vmem>>, vector<16x96xf32>
    tpu.vector_store %arg7[%c0_6, %c0_7], %7 {strides = array<i32>} : memref<16x96xf32, #tpu.memory_space<vmem>>, vector<16x96xf32>,
    %c0_i32_8 = arith.constant 0 : i32
    %9 = arith.cmpi eq, %arg2, %c0_i32_8 : i32
    %10 = arith.extui %9 : i1 to i32
    %c0_i32_9 = arith.constant 0 : i32
    %11 = arith.cmpi ne, %10, %c0_i32_9 : i32
    scf.if %11 {
      %c0_10 = arith.constant 0 : index
      %c0_11 = arith.constant 0 : index
      %12 = vector.load %arg7[%c0_10, %c0_11] : memref<16x96xf32, #tpu.memory_space<vmem>>, vector<16x96xf32>
      %c0_12 = arith.constant 0 : index
      %c0_13 = arith.constant 0 : index
      %13 = vector.load %arg5[%c0_12, %c0_13] : memref<1x96xf32, #tpu.memory_space<vmem>>, vector<1x96xf32>
      %14 = vector.broadcast %13 : vector<1x96xf32> to vector<16x96xf32>
      %15 = arith.addf %12, %14 : vector<16x96xf32>
      %c0_14 = arith.constant 0 : index
      %c0_15 = arith.constant 0 : index
      %16 = vector.load %arg6[%c0_14, %c0_15] : memref<16x96xf32, #tpu.memory_space<vmem>>, vector<16x96xf32>
      tpu.vector_store %arg6[%c0_14, %c0_15], %15 {strides = array<i32>} : memref<16x96xf32, #tpu.memory_space<vmem>>, vector<16x96xf32>,
    } else {
    }
    return
  }
  func.func @transform_0(%arg0: i32, %arg1: i32, %arg2: i32) -> (i32, i32) {
    %c0_i32 = arith.constant 0 : i32
    return %arg0, %arg2 : i32, i32
  }
  func.func @transform_1(%arg0: i32, %arg1: i32, %arg2: i32) -> (i32, i32) {
    %c0_i32 = arith.constant 0 : i32
    return %arg2, %arg1 : i32, i32
  }
  func.func @transform_2(%arg0: i32, %arg1: i32, %arg2: i32) -> (i32, i32) {
    %c0_i32 = arith.constant 0 : i32
    %c0_i32_0 = arith.constant 0 : i32
    return %c0_i32, %arg1 : i32, i32
  }
  func.func @transform_3(%arg0: i32, %arg1: i32, %arg2: i32) -> (i32, i32) {
    %c0_i32 = arith.constant 0 : i32
    return %arg0, %arg1 : i32, i32
  }
}

module attributes {stable_mosaic.version = 11 : i64} {
  func.func @_linear_kernel(%arg0: i32, %arg1: i32, %arg2: i32, %arg3: memref<16x32xf32, #tpu.memory_space<vmem>>, %arg4: memref<32x32xf32, #tpu.memory_space<vmem>>, %arg5: memref<1x32xf32, #tpu.memory_space<vmem>>, %arg6: memref<16x32xf32, #tpu.memory_space<vmem>>, %arg7: memref<16x32xf32, #tpu.memory_space<vmem>>, %arg8: memref<16x32xf32, #tpu.memory_space<vmem>>) attributes {dimension_semantics = [#tpu.dimension_semantics<parallel>, #tpu.dimension_semantics<parallel>, #tpu.dimension_semantics<arbitrary>], iteration_bounds = array<i64: 1, 1, 1>, scalar_prefetch = 0 : i64, scratch_operands = 1 : i64, tpu.core_type = #tpu.core_type<tc>, window_params = [{transform_indices = @transform_0, window_bounds = array<i64: 16, 32>}, {transform_indices = @transform_1, window_bounds = array<i64: 32, 32>}, {transform_indices = @transform_2, window_bounds = array<i64: 1, 32>}, {transform_indices = @transform_3, window_bounds = array<i64: 16, 32>}, {transform_indices = @transform_4, window_bounds = array<i64: 16, 32>}]} {
    %c0_i32 = arith.constant 0 : i32
    %0 = arith.cmpi eq, %arg2, %c0_i32 : i32
    %1 = arith.extui %0 : i1 to i32
    %c0_i32_0 = arith.constant 0 : i32
    %2 = arith.cmpi ne, %1, %c0_i32_0 : i32
    scf.if %2 {
      %cst_10 = arith.constant 0.000000e+00 : f32
      %12 = vector.broadcast %cst_10 : f32 to vector<16x32xf32>
      %c0_11 = arith.constant 0 : index
      %c0_12 = arith.constant 0 : index
      %13 = vector.load %arg8[%c0_11, %c0_12] : memref<16x32xf32, #tpu.memory_space<vmem>>, vector<16x32xf32>
      tpu.vector_store %arg8[%c0_11, %c0_12], %12 {strides = array<i32>} : memref<16x32xf32, #tpu.memory_space<vmem>>, vector<16x32xf32>,
    } else {
    }
    %c0 = arith.constant 0 : index
    %c0_1 = arith.constant 0 : index
    %3 = vector.load %arg8[%c0, %c0_1] : memref<16x32xf32, #tpu.memory_space<vmem>>, vector<16x32xf32>
    %c0_2 = arith.constant 0 : index
    %c0_3 = arith.constant 0 : index
    %4 = vector.load %arg3[%c0_2, %c0_3] : memref<16x32xf32, #tpu.memory_space<vmem>>, vector<16x32xf32>
    %c0_4 = arith.constant 0 : index
    %c0_5 = arith.constant 0 : index
    %5 = vector.load %arg4[%c0_4, %c0_5] : memref<32x32xf32, #tpu.memory_space<vmem>>, vector<32x32xf32>
    %cst = arith.constant dense<0.000000e+00> : vector<16x32xf32>
    %6 = tpu.matmul %4, %5, %cst {dimension_numbers = #tpu.dot_dimension_numbers<[1], [0], [0], [1], [0, 0, 1, 1], [], []>} : vector<16x32xf32>, vector<32x32xf32>, vector<16x32xf32> -> vector<16x32xf32>
    %7 = arith.addf %3, %6 : vector<16x32xf32>
    %c0_6 = arith.constant 0 : index
    %c0_7 = arith.constant 0 : index
    %8 = vector.load %arg8[%c0_6, %c0_7] : memref<16x32xf32, #tpu.memory_space<vmem>>, vector<16x32xf32>
    tpu.vector_store %arg8[%c0_6, %c0_7], %7 {strides = array<i32>} : memref<16x32xf32, #tpu.memory_space<vmem>>, vector<16x32xf32>,
    %c0_i32_8 = arith.constant 0 : i32
    %9 = arith.cmpi eq, %arg2, %c0_i32_8 : i32
    %10 = arith.extui %9 : i1 to i32
    %c0_i32_9 = arith.constant 0 : i32
    %11 = arith.cmpi ne, %10, %c0_i32_9 : i32
    scf.if %11 {
      %c0_10 = arith.constant 0 : index
      %c0_11 = arith.constant 0 : index
      %12 = vector.load %arg8[%c0_10, %c0_11] : memref<16x32xf32, #tpu.memory_space<vmem>>, vector<16x32xf32>
      %c0_12 = arith.constant 0 : index
      %c0_13 = arith.constant 0 : index
      %13 = vector.load %arg5[%c0_12, %c0_13] : memref<1x32xf32, #tpu.memory_space<vmem>>, vector<1x32xf32>
      %14 = vector.broadcast %13 : vector<1x32xf32> to vector<16x32xf32>
      %15 = arith.addf %12, %14 : vector<16x32xf32>
      %c0_14 = arith.constant 0 : index
      %c0_15 = arith.constant 0 : index
      %16 = vector.load %arg6[%c0_14, %c0_15] : memref<16x32xf32, #tpu.memory_space<vmem>>, vector<16x32xf32>
      %17 = arith.addf %15, %16 : vector<16x32xf32>
      %c0_16 = arith.constant 0 : index
      %c0_17 = arith.constant 0 : index
      %18 = vector.load %arg7[%c0_16, %c0_17] : memref<16x32xf32, #tpu.memory_space<vmem>>, vector<16x32xf32>
      tpu.vector_store %arg7[%c0_16, %c0_17], %17 {strides = array<i32>} : memref<16x32xf32, #tpu.memory_space<vmem>>, vector<16x32xf32>,
    } else {
    }
    return
  }
  func.func @transform_0(%arg0: i32, %arg1: i32, %arg2: i32) -> (i32, i32) {
    %c0_i32 = arith.constant 0 : i32
    return %arg0, %arg2 : i32, i32
  }
  func.func @transform_1(%arg0: i32, %arg1: i32, %arg2: i32) -> (i32, i32) {
    %c0_i32 = arith.constant 0 : i32
    return %arg2, %arg1 : i32, i32
  }
  func.func @transform_2(%arg0: i32, %arg1: i32, %arg2: i32) -> (i32, i32) {
    %c0_i32 = arith.constant 0 : i32
    %c0_i32_0 = arith.constant 0 : i32
    return %c0_i32, %arg1 : i32, i32
  }
  func.func @transform_3(%arg0: i32, %arg1: i32, %arg2: i32) -> (i32, i32) {
    %c0_i32 = arith.constant 0 : i32
    return %arg0, %arg1 : i32, i32
  }
  func.func @transform_4(%arg0: i32, %arg1: i32, %arg2: i32) -> (i32, i32) {
    %c0_i32 = arith.constant 0 : i32
    return %arg0, %arg1 : i32, i32
  }
}

module attributes {stable_mosaic.version = 11 : i64} {
  func.func @_linear_kernel(%arg0: i32, %arg1: i32, %arg2: i32, %arg3: memref<16x32xf32, #tpu.memory_space<vmem>>, %arg4: memref<32x32xf32, #tpu.memory_space<vmem>>, %arg5: memref<16x32xf32, #tpu.memory_space<vmem>>, %arg6: memref<16x32xf32, #tpu.memory_space<vmem>>) attributes {dimension_semantics = [#tpu.dimension_semantics<parallel>, #tpu.dimension_semantics<parallel>, #tpu.dimension_semantics<arbitrary>], iteration_bounds = array<i64: 1, 1, 1>, scalar_prefetch = 0 : i64, scratch_operands = 1 : i64, tpu.core_type = #tpu.core_type<tc>, window_params = [{transform_indices = @transform_0, window_bounds = array<i64: 16, 32>}, {transform_indices = @transform_1, window_bounds = array<i64: 32, 32>}, {transform_indices = @transform_2, window_bounds = array<i64: 16, 32>}]} {
    %c0_i32 = arith.constant 0 : i32
    %0 = arith.cmpi eq, %arg2, %c0_i32 : i32
    %1 = arith.extui %0 : i1 to i32
    %c0_i32_0 = arith.constant 0 : i32
    %2 = arith.cmpi ne, %1, %c0_i32_0 : i32
    scf.if %2 {
      %cst_10 = arith.constant 0.000000e+00 : f32
      %12 = vector.broadcast %cst_10 : f32 to vector<16x32xf32>
      %c0_11 = arith.constant 0 : index
      %c0_12 = arith.constant 0 : index
      %13 = vector.load %arg6[%c0_11, %c0_12] : memref<16x32xf32, #tpu.memory_space<vmem>>, vector<16x32xf32>
      tpu.vector_store %arg6[%c0_11, %c0_12], %12 {strides = array<i32>} : memref<16x32xf32, #tpu.memory_space<vmem>>, vector<16x32xf32>,
    } else {
    }
    %c0 = arith.constant 0 : index
    %c0_1 = arith.constant 0 : index
    %3 = vector.load %arg6[%c0, %c0_1] : memref<16x32xf32, #tpu.memory_space<vmem>>, vector<16x32xf32>
    %c0_2 = arith.constant 0 : index
    %c0_3 = arith.constant 0 : index
    %4 = vector.load %arg3[%c0_2, %c0_3] : memref<16x32xf32, #tpu.memory_space<vmem>>, vector<16x32xf32>
    %c0_4 = arith.constant 0 : index
    %c0_5 = arith.constant 0 : index
    %5 = vector.load %arg4[%c0_4, %c0_5] : memref<32x32xf32, #tpu.memory_space<vmem>>, vector<32x32xf32>
    %cst = arith.constant dense<0.000000e+00> : vector<16x32xf32>
    %6 = tpu.matmul %4, %5, %cst {dimension_numbers = #tpu.dot_dimension_numbers<[1], [0], [0], [1], [0, 0, 1, 1], [], []>} : vector<16x32xf32>, vector<32x32xf32>, vector<16x32xf32> -> vector<16x32xf32>
    %7 = arith.addf %3, %6 : vector<16x32xf32>
    %c0_6 = arith.constant 0 : index
    %c0_7 = arith.constant 0 : index
    %8 = vector.load %arg6[%c0_6, %c0_7] : memref<16x32xf32, #tpu.memory_space<vmem>>, vector<16x32xf32>
    tpu.vector_store %arg6[%c0_6, %c0_7], %7 {strides = array<i32>} : memref<16x32xf32, #tpu.memory_space<vmem>>, vector<16x32xf32>,
    %c0_i32_8 = arith.constant 0 : i32
    %9 = arith.cmpi eq, %arg2, %c0_i32_8 : i32
    %10 = arith.extui %9 : i1 to i32
    %c0_i32_9 = arith.constant 0 : i32
    %11 = arith.cmpi ne, %10, %c0_i32_9 : i32
    scf.if %11 {
      %c0_10 = arith.constant 0 : index
      %c0_11 = arith.constant 0 : index
      %12 = vector.load %arg6[%c0_10, %c0_11] : memref<16x32xf32, #tpu.memory_space<vmem>>, vector<16x32xf32>
      %c0_12 = arith.constant 0 : index
      %c0_13 = arith.constant 0 : index
      %13 = vector.load %arg5[%c0_12, %c0_13] : memref<16x32xf32, #tpu.memory_space<vmem>>, vector<16x32xf32>
      tpu.vector_store %arg5[%c0_12, %c0_13], %12 {strides = array<i32>} : memref<16x32xf32, #tpu.memory_space<vmem>>, vector<16x32xf32>,
    } else {
    }
    return
  }
  func.func @transform_0(%arg0: i32, %arg1: i32, %arg2: i32) -> (i32, i32) {
    %c0_i32 = arith.constant 0 : i32
    return %arg0, %arg2 : i32, i32
  }
  func.func @transform_1(%arg0: i32, %arg1: i32, %arg2: i32) -> (i32, i32) {
    %c0_i32 = arith.constant 0 : i32
    return %arg2, %arg1 : i32, i32
  }
  func.func @transform_2(%arg0: i32, %arg1: i32, %arg2: i32) -> (i32, i32) {
    %c0_i32 = arith.constant 0 : i32
    return %arg0, %arg1 : i32, i32
  }
}

module attributes {stable_mosaic.version = 11 : i64} {
  func.func @_linear_kernel(%arg0: i32, %arg1: i32, %arg2: i32, %arg3: memref<16x32xf32, #tpu.memory_space<vmem>>, %arg4: memref<32x32xf32, #tpu.memory_space<vmem>>, %arg5: memref<16x32xf32, #tpu.memory_space<vmem>>, %arg6: memref<16x32xf32, #tpu.memory_space<vmem>>, %arg7: memref<16x32xf32, #tpu.memory_space<vmem>>) attributes {dimension_semantics = [#tpu.dimension_semantics<parallel>, #tpu.dimension_semantics<parallel>, #tpu.dimension_semantics<arbitrary>], iteration_bounds = array<i64: 1, 1, 1>, scalar_prefetch = 0 : i64, scratch_operands = 1 : i64, tpu.core_type = #tpu.core_type<tc>, window_params = [{transform_indices = @transform_0, window_bounds = array<i64: 16, 32>}, {transform_indices = @transform_1, window_bounds = array<i64: 32, 32>}, {transform_indices = @transform_2, window_bounds = array<i64: 16, 32>}, {transform_indices = @transform_3, window_bounds = array<i64: 16, 32>}]} {
    %c0_i32 = arith.constant 0 : i32
    %0 = arith.cmpi eq, %arg2, %c0_i32 : i32
    %1 = arith.extui %0 : i1 to i32
    %c0_i32_0 = arith.constant 0 : i32
    %2 = arith.cmpi ne, %1, %c0_i32_0 : i32
    scf.if %2 {
      %cst_10 = arith.constant 0.000000e+00 : f32
      %12 = vector.broadcast %cst_10 : f32 to vector<16x32xf32>
      %c0_11 = arith.constant 0 : index
      %c0_12 = arith.constant 0 : index
      %13 = vector.load %arg7[%c0_11, %c0_12] : memref<16x32xf32, #tpu.memory_space<vmem>>, vector<16x32xf32>
      tpu.vector_store %arg7[%c0_11, %c0_12], %12 {strides = array<i32>} : memref<16x32xf32, #tpu.memory_space<vmem>>, vector<16x32xf32>,
    } else {
    }
    %c0 = arith.constant 0 : index
    %c0_1 = arith.constant 0 : index
    %3 = vector.load %arg7[%c0, %c0_1] : memref<16x32xf32, #tpu.memory_space<vmem>>, vector<16x32xf32>
    %c0_2 = arith.constant 0 : index
    %c0_3 = arith.constant 0 : index
    %4 = vector.load %arg3[%c0_2, %c0_3] : memref<16x32xf32, #tpu.memory_space<vmem>>, vector<16x32xf32>
    %c0_4 = arith.constant 0 : index
    %c0_5 = arith.constant 0 : index
    %5 = vector.load %arg4[%c0_4, %c0_5] : memref<32x32xf32, #tpu.memory_space<vmem>>, vector<32x32xf32>
    %cst = arith.constant dense<0.000000e+00> : vector<16x32xf32>
    %6 = tpu.matmul %4, %5, %cst {dimension_numbers = #tpu.dot_dimension_numbers<[1], [0], [0], [1], [0, 0, 1, 1], [], []>} : vector<16x32xf32>, vector<32x32xf32>, vector<16x32xf32> -> vector<16x32xf32>
    %7 = arith.addf %3, %6 : vector<16x32xf32>
    %c0_6 = arith.constant 0 : index
    %c0_7 = arith.constant 0 : index
    %8 = vector.load %arg7[%c0_6, %c0_7] : memref<16x32xf32, #tpu.memory_space<vmem>>, vector<16x32xf32>
    tpu.vector_store %arg7[%c0_6, %c0_7], %7 {strides = array<i32>} : memref<16x32xf32, #tpu.memory_space<vmem>>, vector<16x32xf32>,
    %c0_i32_8 = arith.constant 0 : i32
    %9 = arith.cmpi eq, %arg2, %c0_i32_8 : i32
    %10 = arith.extui %9 : i1 to i32
    %c0_i32_9 = arith.constant 0 : i32
    %11 = arith.cmpi ne, %10, %c0_i32_9 : i32
    scf.if %11 {
      %c0_10 = arith.constant 0 : index
      %c0_11 = arith.constant 0 : index
      %12 = vector.load %arg7[%c0_10, %c0_11] : memref<16x32xf32, #tpu.memory_space<vmem>>, vector<16x32xf32>
      %c0_12 = arith.constant 0 : index
      %c0_13 = arith.constant 0 : index
      %13 = vector.load %arg5[%c0_12, %c0_13] : memref<16x32xf32, #tpu.memory_space<vmem>>, vector<16x32xf32>
      %14 = arith.addf %12, %13 : vector<16x32xf32>
      %c0_14 = arith.constant 0 : index
      %c0_15 = arith.constant 0 : index
      %15 = vector.load %arg6[%c0_14, %c0_15] : memref<16x32xf32, #tpu.memory_space<vmem>>, vector<16x32xf32>
      tpu.vector_store %arg6[%c0_14, %c0_15], %14 {strides = array<i32>} : memref<16x32xf32, #tpu.memory_space<vmem>>, vector<16x32xf32>,
    } else {
    }
    return
  }
  func.func @transform_0(%arg0: i32, %arg1: i32, %arg2: i32) -> (i32, i32) {
    %c0_i32 = arith.constant 0 : i32
    return %arg0, %arg2 : i32, i32
  }
  func.func @transform_1(%arg0: i32, %arg1: i32, %arg2: i32) -> (i32, i32) {
    %c0_i32 = arith.constant 0 : i32
    return %arg2, %arg1 : i32, i32
  }
  func.func @transform_2(%arg0: i32, %arg1: i32, %arg2: i32) -> (i32, i32) {
    %c0_i32 = arith.constant 0 : i32
    return %arg0, %arg1 : i32, i32
  }
  func.func @transform_3(%arg0: i32, %arg1: i32, %arg2: i32) -> (i32, i32) {
    %c0_i32 = arith.constant 0 : i32
    return %arg0, %arg1 : i32, i32
  }
}

</mosaic_0001>

<llo_original>
// kernel: transformer_layer.5
$region0: #{transformer_layer.5}
  #allocation0 [shape = 'u32[]', space=smem, size = 0x4, offset = 0x4, fixed_abs, tag = 'smem constant byte address 0x4 - core index']
  #allocation1 [shape = 'u32[144,128]{1,0:T(1,128)}', space=vmem, size = 0x12000, scoped, tag = 'internal scratch']
  #allocation2 [shape = 'f32[16,96]{1,0:T(8,128)}', space=vmem, size = 0x2000, scoped, tag = 'scratch operand']
  %s0 = inlined_call_operand.vmem [shape: f32[16,32], index: 0, kind: input, shape index: {}]
  %s1 = inlined_call_operand.vmem [shape: f32[32,96], index: 1, kind: input, shape index: {}]
  %s2 = inlined_call_operand.vmem [shape: f32[1,96], index: 2, kind: input, shape index: {}]
  %s3 = inlined_call_operand.vmem [shape: f32[16,96], index: 3, kind: output, shape index: {}]
  %s4 = sld [smem:[#allocation0]]
  $region30: #{transformer_layer.5} parent=0
    _
  %s6 = ssub.s32 1, %s4
  %s7 = scalar_select 0, %s6, %s4
  // Predicated region
  $region2: #{transformer_layer.5} parent=0 // pred_check
    _
  $region3: #{transformer_layer.5} parent=0 // pred_check_branch
    %9 = sbr.rel (0) target = $region5
  $region4: #{transformer_layer.5} parent=0 // pred_region
    _
  $region5: #{transformer_layer.5} parent=0 // pred_fallthru
    _
  // Predicated region
  $region6: #{transformer_layer.5} parent=0 // pred_check
    _
  $region7: #{transformer_layer.5} parent=0 // pred_check_branch
    %11 = sbr.rel (0) target = $region9
  $region8: #{transformer_layer.5} parent=0 // pred_region
    _
  $region9: #{transformer_layer.5} parent=0 // pred_fallthru
    _
  // Predicated region
  $region10: #{transformer_layer.5} parent=0 // pred_check
    _
  $region11: #{transformer_layer.5} parent=0 // pred_check_branch
    %13 = sbr.rel (0) target = $region13
  $region12: #{transformer_layer.5} parent=0 // pred_region
    _
  $region13: #{transformer_layer.5} parent=0 // pred_fallthru
    _
  %p14 = scmp.eq.s32.totalorder 0, 0
  // Predicated region
  $region14: #{transformer_layer.5} parent=0 // pred_check
    %p15 = pneg %p14
  $region15: #{transformer_layer.5} parent=0 // pred_check_branch
    %17 = sbr.rel (%p15) target = $region17
  $region16: #{transformer_layer.5} parent=0 // pred_region
    %vm18 = vcmask 785408
    %19 = vst.msk [vmem:[#allocation2] sm:$0xff] %vm18, 0.0
    %20 = vst.msk [vmem:[#allocation2 + $0x8] sm:$0xff] %vm18, 0.0
  $region17: #{transformer_layer.5} parent=0 // pred_fallthru
    _
  %v21 = vld [vmem:[#allocation2] sm:$0xff]
  %v22 = vld [vmem:[#allocation2 + $0x8] sm:$0xff]
  %v23 = vld [vmem:[%s0] sm:$0xff]
  %v24 = vld [vmem:[%s0 + $0x8] sm:$0xff]
  %v25 = vld [vmem:[%s1] sm:$0xff]
  %v26 = vld [vmem:[%s1 + $0x8] sm:$0xff]
  %v27 = vld [vmem:[%s1 + $0x10] sm:$0xff]
  %v28 = vld [vmem:[%s1 + $0x18] sm:$0xff]
  %vm29 = vcmask 261120
  %v31 = vsel %vm29, %v23, 0
  %v34 = vsel %vm29, %v24, 0
  %36 = vmatprep.subr.mxu0 0.0
  %37 = vmatpush1.msra.mxu0 0.0
  %38 = vmatprep.subr.mxu0 0.0
  %39 = vmatpush1.msra.mxu0 0.0
  %40 = vmatprep.subr.mxu0 0.0
  %41 = vmatpush1.msra.mxu0 0.0
  %42 = vmatprep.subr.mxu0 0.0
  %43 = vmatpush1.msra.mxu0 0.0
  %44 = vmatprep.subr.mxu0 0.0
  %45 = vmatpush1.msra.mxu0 0.0
  %46 = vmatprep.subr.mxu0 0.0
  %47 = vmatpush1.msra.mxu0 0.0
  %48 = vmatprep.subr.mxu0 0.0
  %49 = vmatpush1.msra.mxu0 0.0
  %50 = vmatprep.subr.mxu0 0.0
  %51 = vmatpush1.msra.mxu0 0.0
  %52 = vmatprep.subr.mxu0 0.0
  %53 = vmatpush1.msra.mxu0 0.0
  %54 = vmatprep.subr.mxu0 0.0
  %55 = vmatpush1.msra.mxu0 0.0
  %56 = vmatprep.subr.mxu0 0.0
  %57 = vmatpush1.msra.mxu0 0.0
  %58 = vmatprep.subr.mxu0 0.0
  %59 = vmatpush1.msra.mxu0 0.0
  %60 = vmatprep.subr.mxu0 0.0
  %61 = vmatpush1.msra.mxu0 %v28
  %62 = vmatprep.subr.mxu0 0.0
  %63 = vmatpush1.msra.mxu0 %v27
  %64 = vmatprep.subr.mxu0 0.0
  %65 = vmatpush1.msra.mxu0 %v26
  %66 = vmatprep.subr.mxu0 0.0
  %67 = vmatpush1.msra.mxu0 %v25
  %68 = vmatprep.subr.mxu0 0.0
  %69 = vmatpush2.msra.mxu0 0.0
  %70 = vmatprep.subr.mxu0 0.0
  %71 = vmatpush2.msra.mxu0 0.0
  %72 = vmatprep.subr.mxu0 0.0
  %73 = vmatpush2.msra.mxu0 0.0
  %74 = vmatprep.subr.mxu0 0.0
  %75 = vmatpush2.msra.mxu0 0.0
  %76 = vmatprep.subr.mxu0 0.0
  %77 = vmatpush2.msra.mxu0 0.0
  %78 = vmatprep.subr.mxu0 0.0
  %79 = vmatpush2.msra.mxu0 0.0
  %80 = vmatprep.subr.mxu0 0.0
  %81 = vmatpush2.msra.mxu0 0.0
  %82 = vmatprep.subr.mxu0 0.0
  %83 = vmatpush2.msra.mxu0 0.0
  %84 = vmatprep.subr.mxu0 0.0
  %85 = vmatpush2.msra.mxu0 0.0
  %86 = vmatprep.subr.mxu0 0.0
  %87 = vmatpush2.msra.mxu0 0.0
  %88 = vmatprep.subr.mxu0 0.0
  %89 = vmatpush2.msra.mxu0 0.0
  %90 = vmatprep.subr.mxu0 0.0
  %91 = vmatpush2.msra.mxu0 0.0
  %92 = vmatprep.subr.mxu0 0.0
  %93 = vmatpush2.msra.mxu0 0.0
  %94 = vmatprep.subr.mxu0 0.0
  %95 = vmatpush2.msra.mxu0 0.0
  %96 = vmatprep.subr.mxu0 0.0
  %97 = vmatpush2.msra.mxu0 0.0
  %98 = vmatprep.subr.mxu0 0.0
  %99 = vmatpush2.msra.mxu0 0.0
  %100 = vmatprep.mubr.f32.mxu0 0.0
  %101 = vmatmul.mubr.f32.gmra.mxu0 %v31
  %v102 = vpop.f32.mrf.mxu0
  %v103 = vadd.f32 0.0, %v102
  %v104 = vpop.f32.mrf.mxu0
  %105 = vmatprep.mubr.f32.mxu0 0.0
  %106 = vmatmul.mubr.f32.gmra.mxu0 %v34
  %v107 = vpop.f32.mrf.mxu0
  %v108 = vadd.f32 0.0, %v107
  %v109 = vpop.f32.mrf.mxu0
  %110 = vdwg.mxu0
  %v111 = vadd.f32 %v21, %v103
  %v112 = vadd.f32 %v22, %v108
  %vm113 = vcmask 785408
  %114 = vst.msk [vmem:[#allocation2] sm:$0xff] %vm113, %v111
  %115 = vst.msk [vmem:[#allocation2 + $0x8] sm:$0xff] %vm113, %v112
  // Predicated region
  $region18: #{transformer_layer.5} parent=0 // pred_check
    %p116 = pneg %p14
  $region19: #{transformer_layer.5} parent=0 // pred_check_branch
    %118 = sbr.rel (%p116) target = $region21
  $region20: #{transformer_layer.5} parent=0 // pred_region
    %v119 = vld [vmem:[#allocation2] sm:$0xff]
    %v120 = vld [vmem:[#allocation2 + $0x8] sm:$0xff]
    %v121 = vld [vmem:[%s2] sm:$0x1]
    %v123 = vlaneseq
    %v124 = vshrl.u32 %v123, 7
    %v125 = vsub.s32 0, %v124
    %v126 = vrot.slane %v121, %v125
    %v128 = vadd.f32 %v119, %v126
    %v129 = vadd.f32 %v120, %v126
    %130 = vst.msk [vmem:[%s3] sm:$0xff] %vm113, %v128
    %131 = vst.msk [vmem:[%s3 + $0x8] sm:$0xff] %vm113, %v129
  $region21: #{transformer_layer.5} parent=0 // pred_fallthru
    _
  // Predicated region
  $region22: #{transformer_layer.5} parent=0 // pred_check
    _
  $region23: #{transformer_layer.5} parent=0 // pred_check_branch
    %133 = sbr.rel (0) target = $region25
  $region24: #{transformer_layer.5} parent=0 // pred_region
    _
  $region25: #{transformer_layer.5} parent=0 // pred_fallthru
    _
  // Predicated region
  $region26: #{transformer_layer.5} parent=0 // pred_check
    _
  $region27: #{transformer_layer.5} parent=0 // pred_check_branch
    %135 = sbr.rel (0) target = $region29
  $region28: #{transformer_layer.5} parent=0 // pred_region
    _
  $region29: #{transformer_layer.5} parent=0 // pred_fallthru
    _

// kernel: transformer_layer.7
$region0: #{transformer_layer.7}
  #allocation0 [shape = 'u32[]', space=smem, size = 0x4, offset = 0x4, fixed_abs, tag = 'smem constant byte address 0x4 - core index']
  #allocation1 [shape = 'u32[144,128]{1,0:T(1,128)}', space=vmem, size = 0x12000, scoped, tag = 'internal scratch']
  #allocation2 [shape = 'f32[16,32]{1,0:T(8,128)}', space=vmem, size = 0x2000, scoped, tag = 'scratch operand']
  %s0 = inlined_call_operand.vmem [shape: f32[16,32], index: 0, kind: input, shape index: {}]
  %s1 = inlined_call_operand.vmem [shape: f32[32,32], index: 1, kind: input, shape index: {}]
  %s2 = inlined_call_operand.vmem [shape: f32[1,32], index: 2, kind: input, shape index: {}]
  %s3 = inlined_call_operand.vmem [shape: f32[16,32], index: 3, kind: input, shape index: {}]
  %s4 = inlined_call_operand.vmem [shape: f32[16,32], index: 4, kind: output, shape index: {}]
  %s5 = sld [smem:[#allocation0]]
  $region34: #{transformer_layer.7} parent=0
    _
  %s7 = ssub.s32 1, %s5
  %s8 = scalar_select 0, %s7, %s5
  // Predicated region
  $region2: #{transformer_layer.7} parent=0 // pred_check
    _
  $region3: #{transformer_layer.7} parent=0 // pred_check_branch
    %10 = sbr.rel (0) target = $region5
  $region4: #{transformer_layer.7} parent=0 // pred_region
    _
  $region5: #{transformer_layer.7} parent=0 // pred_fallthru
    _
  // Predicated region
  $region6: #{transformer_layer.7} parent=0 // pred_check
    _
  $region7: #{transformer_layer.7} parent=0 // pred_check_branch
    %12 = sbr.rel (0) target = $region9
  $region8: #{transformer_layer.7} parent=0 // pred_region
    _
  $region9: #{transformer_layer.7} parent=0 // pred_fallthru
    _
  // Predicated region
  $region10: #{transformer_layer.7} parent=0 // pred_check
    _
  $region11: #{transformer_layer.7} parent=0 // pred_check_branch
    %14 = sbr.rel (0) target = $region13
  $region12: #{transformer_layer.7} parent=0 // pred_region
    _
  $region13: #{transformer_layer.7} parent=0 // pred_fallthru
    _
  // Predicated region
  $region14: #{transformer_layer.7} parent=0 // pred_check
    _
  $region15: #{transformer_layer.7} parent=0 // pred_check_branch
    %16 = sbr.rel (0) target = $region17
  $region16: #{transformer_layer.7} parent=0 // pred_region
    _
  $region17: #{transformer_layer.7} parent=0 // pred_fallthru
    _
  %p17 = scmp.eq.s32.totalorder 0, 0
  // Predicated region
  $region18: #{transformer_layer.7} parent=0 // pred_check
    %p18 = pneg %p17
  $region19: #{transformer_layer.7} parent=0 // pred_check_branch
    %20 = sbr.rel (%p18) target = $region21
  $region20: #{transformer_layer.7} parent=0 // pred_region
    %vm21 = vcmask 261120
    %22 = vst.msk [vmem:[#allocation2] sm:$0xff] %vm21, 0.0
    %23 = vst.msk [vmem:[#allocation2 + $0x8] sm:$0xff] %vm21, 0.0
  $region21: #{transformer_layer.7} parent=0 // pred_fallthru
    _
  %v24 = vld [vmem:[#allocation2] sm:$0xff]
  %v25 = vld [vmem:[#allocation2 + $0x8] sm:$0xff]
  %v26 = vld [vmem:[%s0] sm:$0xff]
  %v27 = vld [vmem:[%s0 + $0x8] sm:$0xff]
  %v28 = vld [vmem:[%s1] sm:$0xff]
  %v29 = vld [vmem:[%s1 + $0x8] sm:$0xff]
  %v30 = vld [vmem:[%s1 + $0x10] sm:$0xff]
  %v31 = vld [vmem:[%s1 + $0x18] sm:$0xff]
  %vm32 = vcmask 261120
  %v34 = vsel %vm32, %v26, 0
  %v37 = vsel %vm32, %v27, 0
  %39 = vmatprep.subr.mxu0 0.0
  %40 = vmatpush1.msra.mxu0 0.0
  %41 = vmatprep.subr.mxu0 0.0
  %42 = vmatpush1.msra.mxu0 0.0
  %43 = vmatprep.subr.mxu0 0.0
  %44 = vmatpush1.msra.mxu0 0.0
  %45 = vmatprep.subr.mxu0 0.0
  %46 = vmatpush1.msra.mxu0 0.0
  %47 = vmatprep.subr.mxu0 0.0
  %48 = vmatpush1.msra.mxu0 0.0
  %49 = vmatprep.subr.mxu0 0.0
  %50 = vmatpush1.msra.mxu0 0.0
  %51 = vmatprep.subr.mxu0 0.0
  %52 = vmatpush1.msra.mxu0 0.0
  %53 = vmatprep.subr.mxu0 0.0
  %54 = vmatpush1.msra.mxu0 0.0
  %55 = vmatprep.subr.mxu0 0.0
  %56 = vmatpush1.msra.mxu0 0.0
  %57 = vmatprep.subr.mxu0 0.0
  %58 = vmatpush1.msra.mxu0 0.0
  %59 = vmatprep.subr.mxu0 0.0
  %60 = vmatpush1.msra.mxu0 0.0
  %61 = vmatprep.subr.mxu0 0.0
  %62 = vmatpush1.msra.mxu0 0.0
  %63 = vmatprep.subr.mxu0 0.0
  %64 = vmatpush1.msra.mxu0 %v31
  %65 = vmatprep.subr.mxu0 0.0
  %66 = vmatpush1.msra.mxu0 %v30
  %67 = vmatprep.subr.mxu0 0.0
  %68 = vmatpush1.msra.mxu0 %v29
  %69 = vmatprep.subr.mxu0 0.0
  %70 = vmatpush1.msra.mxu0 %v28
  %71 = vmatprep.subr.mxu0 0.0
  %72 = vmatpush2.msra.mxu0 0.0
  %73 = vmatprep.subr.mxu0 0.0
  %74 = vmatpush2.msra.mxu0 0.0
  %75 = vmatprep.subr.mxu0 0.0
  %76 = vmatpush2.msra.mxu0 0.0
  %77 = vmatprep.subr.mxu0 0.0
  %78 = vmatpush2.msra.mxu0 0.0
  %79 = vmatprep.subr.mxu0 0.0
  %80 = vmatpush2.msra.mxu0 0.0
  %81 = vmatprep.subr.mxu0 0.0
  %82 = vmatpush2.msra.mxu0 0.0
  %83 = vmatprep.subr.mxu0 0.0
  %84 = vmatpush2.msra.mxu0 0.0
  %85 = vmatprep.subr.mxu0 0.0
  %86 = vmatpush2.msra.mxu0 0.0
  %87 = vmatprep.subr.mxu0 0.0
  %88 = vmatpush2.msra.mxu0 0.0
  %89 = vmatprep.subr.mxu0 0.0
  %90 = vmatpush2.msra.mxu0 0.0
  %91 = vmatprep.subr.mxu0 0.0
  %92 = vmatpush2.msra.mxu0 0.0
  %93 = vmatprep.subr.mxu0 0.0
  %94 = vmatpush2.msra.mxu0 0.0
  %95 = vmatprep.subr.mxu0 0.0
  %96 = vmatpush2.msra.mxu0 0.0
  %97 = vmatprep.subr.mxu0 0.0
  %98 = vmatpush2.msra.mxu0 0.0
  %99 = vmatprep.subr.mxu0 0.0
  %100 = vmatpush2.msra.mxu0 0.0
  %101 = vmatprep.subr.mxu0 0.0
  %102 = vmatpush2.msra.mxu0 0.0
  %103 = vmatprep.mubr.f32.mxu0 0.0
  %104 = vmatmul.mubr.f32.gmra.mxu0 %v34
  %v105 = vpop.f32.mrf.mxu0
  %v106 = vadd.f32 0.0, %v105
  %v107 = vpop.f32.mrf.mxu0
  %108 = vmatprep.mubr.f32.mxu0 0.0
  %109 = vmatmul.mubr.f32.gmra.mxu0 %v37
  %v110 = vpop.f32.mrf.mxu0
  %v111 = vadd.f32 0.0, %v110
  %v112 = vpop.f32.mrf.mxu0
  %113 = vdwg.mxu0
  %v114 = vadd.f32 %v24, %v106
  %v115 = vadd.f32 %v25, %v111
  %116 = vst.msk [vmem:[#allocation2] sm:$0xff] %vm32, %v114
  %117 = vst.msk [vmem:[#allocation2 + $0x8] sm:$0xff] %vm32, %v115
  // Predicated region
  $region22: #{transformer_layer.7} parent=0 // pred_check
    %p118 = pneg %p17
  $region23: #{transformer_layer.7} parent=0 // pred_check_branch
    %120 = sbr.rel (%p118) target = $region25
  $region24: #{transformer_layer.7} parent=0 // pred_region
    %v121 = vld [vmem:[#allocation2] sm:$0xff]
    %v122 = vld [vmem:[#allocation2 + $0x8] sm:$0xff]
    %v123 = vld [vmem:[%s2] sm:$0x1]
    %v125 = vlaneseq
    %v126 = vshrl.u32 %v125, 7
    %v127 = vsub.s32 0, %v126
    %v128 = vrot.slane %v123, %v127
    %v130 = vadd.f32 %v121, %v128
    %v131 = vadd.f32 %v122, %v128
    %v132 = vld [vmem:[%s3] sm:$0xff]
    %v133 = vld [vmem:[%s3 + $0x8] sm:$0xff]
    %v134 = vadd.f32 %v130, %v132
    %v135 = vadd.f32 %v131, %v133
    %136 = vst.msk [vmem:[%s4] sm:$0xff] %vm32, %v134
    %137 = vst.msk [vmem:[%s4 + $0x8] sm:$0xff] %vm32, %v135
  $region25: #{transformer_layer.7} parent=0 // pred_fallthru
    _
  // Predicated region
  $region26: #{transformer_layer.7} parent=0 // pred_check
    _
  $region27: #{transformer_layer.7} parent=0 // pred_check_branch
    %139 = sbr.rel (0) target = $region29
  $region28: #{transformer_layer.7} parent=0 // pred_region
    _
  $region29: #{transformer_layer.7} parent=0 // pred_fallthru
    _
  // Predicated region
  $region30: #{transformer_layer.7} parent=0 // pred_check
    _
  $region31: #{transformer_layer.7} parent=0 // pred_check_branch
    %141 = sbr.rel (0) target = $region33
  $region32: #{transformer_layer.7} parent=0 // pred_region
    _
  $region33: #{transformer_layer.7} parent=0 // pred_fallthru
    _

// kernel: transformer_layer.8
$region0: #{transformer_layer.8}
  #allocation0 [shape = 'u32[]', space=smem, size = 0x4, offset = 0x4, fixed_abs, tag = 'smem constant byte address 0x4 - core index']
  #allocation1 [shape = 'u32[144,128]{1,0:T(1,128)}', space=vmem, size = 0x12000, scoped, tag = 'internal scratch']
  #allocation2 [shape = 'f32[16,32]{1,0:T(8,128)}', space=vmem, size = 0x2000, scoped, tag = 'scratch operand']
  %s0 = inlined_call_operand.vmem [shape: f32[16,32], index: 0, kind: input, shape index: {}]
  %s1 = inlined_call_operand.vmem [shape: f32[32,32], index: 1, kind: input, shape index: {}]
  %s2 = inlined_call_operand.vmem [shape: f32[16,32], index: 2, kind: output, shape index: {}]
  %s3 = sld [smem:[#allocation0]]
  $region26: #{transformer_layer.8} parent=0
    _
  %s5 = ssub.s32 1, %s3
  %s6 = scalar_select 0, %s5, %s3
  // Predicated region
  $region2: #{transformer_layer.8} parent=0 // pred_check
    _
  $region3: #{transformer_layer.8} parent=0 // pred_check_branch
    %8 = sbr.rel (0) target = $region5
  $region4: #{transformer_layer.8} parent=0 // pred_region
    _
  $region5: #{transformer_layer.8} parent=0 // pred_fallthru
    _
  // Predicated region
  $region6: #{transformer_layer.8} parent=0 // pred_check
    _
  $region7: #{transformer_layer.8} parent=0 // pred_check_branch
    %10 = sbr.rel (0) target = $region9
  $region8: #{transformer_layer.8} parent=0 // pred_region
    _
  $region9: #{transformer_layer.8} parent=0 // pred_fallthru
    _
  %p11 = scmp.eq.s32.totalorder 0, 0
  // Predicated region
  $region10: #{transformer_layer.8} parent=0 // pred_check
    %p12 = pneg %p11
  $region11: #{transformer_layer.8} parent=0 // pred_check_branch
    %14 = sbr.rel (%p12) target = $region13
  $region12: #{transformer_layer.8} parent=0 // pred_region
    %vm15 = vcmask 261120
    %16 = vst.msk [vmem:[#allocation2] sm:$0xff] %vm15, 0.0
    %17 = vst.msk [vmem:[#allocation2 + $0x8] sm:$0xff] %vm15, 0.0
  $region13: #{transformer_layer.8} parent=0 // pred_fallthru
    _
  %v18 = vld [vmem:[#allocation2] sm:$0xff]
  %v19 = vld [vmem:[#allocation2 + $0x8] sm:$0xff]
  %v20 = vld [vmem:[%s0] sm:$0xff]
  %v21 = vld [vmem:[%s0 + $0x8] sm:$0xff]
  %v22 = vld [vmem:[%s1] sm:$0xff]
  %v23 = vld [vmem:[%s1 + $0x8] sm:$0xff]
  %v24 = vld [vmem:[%s1 + $0x10] sm:$0xff]
  %v25 = vld [vmem:[%s1 + $0x18] sm:$0xff]
  %vm26 = vcmask 261120
  %v28 = vsel %vm26, %v20, 0
  %v31 = vsel %vm26, %v21, 0
  %33 = vmatprep.subr.mxu0 0.0
  %34 = vmatpush1.msra.mxu0 0.0
  %35 = vmatprep.subr.mxu0 0.0
  %36 = vmatpush1.msra.mxu0 0.0
  %37 = vmatprep.subr.mxu0 0.0
  %38 = vmatpush1.msra.mxu0 0.0
  %39 = vmatprep.subr.mxu0 0.0
  %40 = vmatpush1.msra.mxu0 0.0
  %41 = vmatprep.subr.mxu0 0.0
  %42 = vmatpush1.msra.mxu0 0.0
  %43 = vmatprep.subr.mxu0 0.0
  %44 = vmatpush1.msra.mxu0 0.0
  %45 = vmatprep.subr.mxu0 0.0
  %46 = vmatpush1.msra.mxu0 0.0
  %47 = vmatprep.subr.mxu0 0.0
  %48 = vmatpush1.msra.mxu0 0.0
  %49 = vmatprep.subr.mxu0 0.0
  %50 = vmatpush1.msra.mxu0 0.0
  %51 = vmatprep.subr.mxu0 0.0
  %52 = vmatpush1.msra.mxu0 0.0
  %53 = vmatprep.subr.mxu0 0.0
  %54 = vmatpush1.msra.mxu0 0.0
  %55 = vmatprep.subr.mxu0 0.0
  %56 = vmatpush1.msra.mxu0 0.0
  %57 = vmatprep.subr.mxu0 0.0
  %58 = vmatpush1.msra.mxu0 %v25
  %59 = vmatprep.subr.mxu0 0.0
  %60 = vmatpush1.msra.mxu0 %v24
  %61 = vmatprep.subr.mxu0 0.0
  %62 = vmatpush1.msra.mxu0 %v23
  %63 = vmatprep.subr.mxu0 0.0
  %64 = vmatpush1.msra.mxu0 %v22
  %65 = vmatprep.subr.mxu0 0.0
  %66 = vmatpush2.msra.mxu0 0.0
  %67 = vmatprep.subr.mxu0 0.0
  %68 = vmatpush2.msra.mxu0 0.0
  %69 = vmatprep.subr.mxu0 0.0
  %70 = vmatpush2.msra.mxu0 0.0
  %71 = vmatprep.subr.mxu0 0.0
  %72 = vmatpush2.msra.mxu0 0.0
  %73 = vmatprep.subr.mxu0 0.0
  %74 = vmatpush2.msra.mxu0 0.0
  %75 = vmatprep.subr.mxu0 0.0
  %76 = vmatpush2.msra.mxu0 0.0
  %77 = vmatprep.subr.mxu0 0.0
  %78 = vmatpush2.msra.mxu0 0.0
  %79 = vmatprep.subr.mxu0 0.0
  %80 = vmatpush2.msra.mxu0 0.0
  %81 = vmatprep.subr.mxu0 0.0
  %82 = vmatpush2.msra.mxu0 0.0
  %83 = vmatprep.subr.mxu0 0.0
  %84 = vmatpush2.msra.mxu0 0.0
  %85 = vmatprep.subr.mxu0 0.0
  %86 = vmatpush2.msra.mxu0 0.0
  %87 = vmatprep.subr.mxu0 0.0
  %88 = vmatpush2.msra.mxu0 0.0
  %89 = vmatprep.subr.mxu0 0.0
  %90 = vmatpush2.msra.mxu0 0.0
  %91 = vmatprep.subr.mxu0 0.0
  %92 = vmatpush2.msra.mxu0 0.0
  %93 = vmatprep.subr.mxu0 0.0
  %94 = vmatpush2.msra.mxu0 0.0
  %95 = vmatprep.subr.mxu0 0.0
  %96 = vmatpush2.msra.mxu0 0.0
  %97 = vmatprep.mubr.f32.mxu0 0.0
  %98 = vmatmul.mubr.f32.gmra.mxu0 %v28
  %v99 = vpop.f32.mrf.mxu0
  %v100 = vadd.f32 0.0, %v99
  %v101 = vpop.f32.mrf.mxu0
  %102 = vmatprep.mubr.f32.mxu0 0.0
  %103 = vmatmul.mubr.f32.gmra.mxu0 %v31
  %v104 = vpop.f32.mrf.mxu0
  %v105 = vadd.f32 0.0, %v104
  %v106 = vpop.f32.mrf.mxu0
  %107 = vdwg.mxu0
  %v108 = vadd.f32 %v18, %v100
  %v109 = vadd.f32 %v19, %v105
  %110 = vst.msk [vmem:[#allocation2] sm:$0xff] %vm26, %v108
  %111 = vst.msk [vmem:[#allocation2 + $0x8] sm:$0xff] %vm26, %v109
  // Predicated region
  $region14: #{transformer_layer.8} parent=0 // pred_check
    %p112 = pneg %p11
  $region15: #{transformer_layer.8} parent=0 // pred_check_branch
    %114 = sbr.rel (%p112) target = $region17
  $region16: #{transformer_layer.8} parent=0 // pred_region
    %v115 = vld [vmem:[#allocation2] sm:$0xff]
    %v116 = vld [vmem:[#allocation2 + $0x8] sm:$0xff]
    %117 = vst.msk [vmem:[%s2] sm:$0xff] %vm26, %v115
    %118 = vst.msk [vmem:[%s2 + $0x8] sm:$0xff] %vm26, %v116
  $region17: #{transformer_layer.8} parent=0 // pred_fallthru
    _
  // Predicated region
  $region18: #{transformer_layer.8} parent=0 // pred_check
    _
  $region19: #{transformer_layer.8} parent=0 // pred_check_branch
    %120 = sbr.rel (0) target = $region21
  $region20: #{transformer_layer.8} parent=0 // pred_region
    _
  $region21: #{transformer_layer.8} parent=0 // pred_fallthru
    _
  // Predicated region
  $region22: #{transformer_layer.8} parent=0 // pred_check
    _
  $region23: #{transformer_layer.8} parent=0 // pred_check_branch
    %122 = sbr.rel (0) target = $region25
  $region24: #{transformer_layer.8} parent=0 // pred_region
    _
  $region25: #{transformer_layer.8} parent=0 // pred_fallthru
    _

// kernel: transformer_layer.6
$region0: #{transformer_layer.6}
  #allocation0 [shape = 'u32[]', space=smem, size = 0x4, offset = 0x4, fixed_abs, tag = 'smem constant byte address 0x4 - core index']
  #allocation1 [shape = 'u32[144,128]{1,0:T(1,128)}', space=vmem, size = 0x12000, scoped, tag = 'internal scratch']
  %s0 = inlined_call_operand.vmem [shape: f32[2,8,32], index: 0, kind: input, shape index: {}]
  %s1 = inlined_call_operand.vmem [shape: f32[2,8,32], index: 1, kind: input, shape index: {}]
  %s2 = inlined_call_operand.vmem [shape: f32[2,8,32], index: 2, kind: input, shape index: {}]
  %s3 = inlined_call_operand.vmem [shape: f32[2,8,32], index: 3, kind: output, shape index: {}]
  %s4 = sld [smem:[#allocation0]]
  $region45: #{transformer_layer.6} parent=0
    _
  %s6 = ssub.s32 1, %s4
  %s7 = scalar_select 0, %s6, %s4
  loop: start=0, step=1, limit=4
  $region2: #{transformer_layer.6} parent=0 // loop_pre_header
    _
  $region3: #{transformer_layer.6} parent=0 // loop_header
    %s9 = sphi 0, %s13
    %p10 = scmp.ge.s32.totalorder %s9, 4
    %s19 = sphi 0, %s21
    %s22 = sphi 0, %s19
    %s23 = sphi 0, %s22
    %s39 = sphi 0, %s23
    %s45 = sphi 0, %s47
    %s48 = sphi 0, %s45
    %s49 = sphi 0, %s48
    %s65 = sphi 0, %s49
    %s71 = sphi 0, %s73
    %s74 = sphi 0, %s71
    %s75 = sphi 0, %s74
    %s91 = sphi 0, %s75
    %s97 = sphi 0, %s99
    %s100 = sphi 0, %s97
    %s101 = sphi 0, %s100
    %s117 = sphi 0, %s101
  $region4: #{transformer_layer.6} parent=0 // loop_header_branch
    %12 = sbr.rel (%p10) target = $region8
  $region5: #{transformer_layer.6} parent=0 // loop_body
    %s14 = ssub.s32 %s9, 1
    %s15 = ssub.s32 %s9, 2
    %s16 = sadd.s32 %s9, 1
    %s17 = ssub.s32 %s9, %s16
    %p18 = scmp.eq.s32.totalorder %s17, 0
    %s20 = sadd.s32 %s19, 1
    %s21 = scalar_select %p18, %s19, %s20
    %p24 = pneg %p18
    %p25 = scmp.eq.s32.totalorder %s9, 1
    %p26 = por %p24, %p25
    %p27 = scmp.ne.s32.totalorder %s19, %s22
    %p28 = scmp.eq.s32.totalorder %s9, 0
    %p29 = por %p27, %p28
    %p30 = scmp.ne.s32.totalorder %s19, %s22
    %p31 = scmp.eq.s32.totalorder %s14, 1
    %p32 = por %p30, %p31
    %p33 = scmp.ne.s32.totalorder %s22, %s23
    %p34 = scmp.eq.s32.totalorder %s14, 0
    %p35 = por %p33, %p34
    %p36 = scmp.ne.s32.totalorder %s22, %s23
    %p37 = scmp.eq.s32.totalorder %s15, 1
    %p38 = por %p36, %p37
    %p40 = scmp.ne.s32.totalorder %s23, %s39
    %p41 = scmp.eq.s32.totalorder %s15, 0
    %p42 = por %p40, %p41
    %s43 = ssub.s32 %s9, %s16
    %p44 = scmp.eq.s32.totalorder %s43, 0
    %s46 = sadd.s32 %s45, 1
    %s47 = scalar_select %p44, %s45, %s46
    %p50 = pneg %p44
    %p51 = scmp.eq.s32.totalorder %s9, 1
    %p52 = por %p50, %p51
    %p53 = scmp.ne.s32.totalorder %s45, %s48
    %p54 = scmp.eq.s32.totalorder %s9, 0
    %p55 = por %p53, %p54
    %p56 = scmp.ne.s32.totalorder %s45, %s48
    %p57 = scmp.eq.s32.totalorder %s14, 1
    %p58 = por %p56, %p57
    %p59 = scmp.ne.s32.totalorder %s48, %s49
    %p60 = scmp.eq.s32.totalorder %s14, 0
    %p61 = por %p59, %p60
    %p62 = scmp.ne.s32.totalorder %s48, %s49
    %p63 = scmp.eq.s32.totalorder %s15, 1
    %p64 = por %p62, %p63
    %p66 = scmp.ne.s32.totalorder %s49, %s65
    %p67 = scmp.eq.s32.totalorder %s15, 0
    %p68 = por %p66, %p67
    %s69 = ssub.s32 %s9, %s16
    %p70 = scmp.eq.s32.totalorder %s69, 0
    %s72 = sadd.s32 %s71, 1
    %s73 = scalar_select %p70, %s71, %s72
    %p76 = pneg %p70
    %p77 = scmp.eq.s32.totalorder %s9, 1
    %p78 = por %p76, %p77
    %p79 = scmp.ne.s32.totalorder %s71, %s74
    %p80 = scmp.eq.s32.totalorder %s9, 0
    %p81 = por %p79, %p80
    %p82 = scmp.ne.s32.totalorder %s71, %s74
    %p83 = scmp.eq.s32.totalorder %s14, 1
    %p84 = por %p82, %p83
    %p85 = scmp.ne.s32.totalorder %s74, %s75
    %p86 = scmp.eq.s32.totalorder %s14, 0
    %p87 = por %p85, %p86
    %p88 = scmp.ne.s32.totalorder %s74, %s75
    %p89 = scmp.eq.s32.totalorder %s15, 1
    %p90 = por %p88, %p89
    %p92 = scmp.ne.s32.totalorder %s75, %s91
    %p93 = scmp.eq.s32.totalorder %s15, 0
    %p94 = por %p92, %p93
    %s95 = ssub.s32 %s9, %s16
    %p96 = scmp.eq.s32.totalorder %s95, 0
    %s98 = sadd.s32 %s97, 1
    %s99 = scalar_select %p96, %s97, %s98
    %p102 = pneg %p96
    %p103 = scmp.eq.s32.totalorder %s9, 1
    %p104 = por %p102, %p103
    %p105 = scmp.ne.s32.totalorder %s97, %s100
    %p106 = scmp.eq.s32.totalorder %s9, 0
    %p107 = por %p105, %p106
    %p108 = scmp.ne.s32.totalorder %s97, %s100
    %p109 = scmp.eq.s32.totalorder %s14, 1
    %p110 = por %p108, %p109
    %p111 = scmp.ne.s32.totalorder %s100, %s101
    %p112 = scmp.eq.s32.totalorder %s14, 0
    %p113 = por %p111, %p112
    %p114 = scmp.ne.s32.totalorder %s100, %s101
    %p115 = scmp.eq.s32.totalorder %s15, 1
    %p116 = por %p114, %p115
    %p118 = scmp.ne.s32.totalorder %s101, %s117
    %p119 = scmp.eq.s32.totalorder %s15, 0
    %p120 = por %p118, %p119
    %p121 = scmp.le.s32.totalorder 1, %s9
    %p122 = scmp.lt.s32.totalorder %s9, 3
    %p123 = pnand %p121, %p122
    %p124 = pneg %p123
    // Predicated region
    $region9: #{transformer_layer.6} parent=5 // pred_check
      _
    $region10: #{transformer_layer.6} parent=5 // pred_check_branch
      %126 = sbr.rel (%p123) target = $region12
    $region11: #{transformer_layer.6} parent=5 // pred_region
      %s127 = ssub.s32 %s9, 1
    $region12: #{transformer_layer.6} parent=5 // pred_fallthru
      _
    %p128 = scmp.lt.s32.totalorder %s9, 2
    // Predicated region
    $region13: #{transformer_layer.6} parent=5 // pred_check
      %p129 = pneg %p128
    $region14: #{transformer_layer.6} parent=5 // pred_check_branch
      %131 = sbr.rel (%p129) target = $region16
    $region15: #{transformer_layer.6} parent=5 // pred_region
      // Predicated region
      $region17: #{transformer_layer.6} parent=15 // pred_check
        %p132 = pneg %p29
      $region18: #{transformer_layer.6} parent=15 // pred_check_branch
        %134 = sbr.rel (%p132) target = $region20
      $region19: #{transformer_layer.6} parent=15 // pred_region
        %p135 = scmp.lt.s32.totalorder %s9, 1
        %s136 = scalar_select %p135, %s9, 1
        %s137 = smul.addr %s136, 8
        %s138 = scalar_lea.vmem %s0, %s137
      $region20: #{transformer_layer.6} parent=15 // pred_fallthru
        _
      // Predicated region
      $region21: #{transformer_layer.6} parent=15 // pred_check
        %p139 = pneg %p55
      $region22: #{transformer_layer.6} parent=15 // pred_check_branch
        %141 = sbr.rel (%p139) target = $region24
      $region23: #{transformer_layer.6} parent=15 // pred_region
        %p142 = scmp.lt.s32.totalorder %s9, 1
        %s143 = scalar_select %p142, %s9, 1
        %s144 = smul.addr %s143, 8
        %s145 = scalar_lea.vmem %s1, %s144
      $region24: #{transformer_layer.6} parent=15 // pred_fallthru
        _
      // Predicated region
      $region25: #{transformer_layer.6} parent=15 // pred_check
        %p146 = pneg %p81
      $region26: #{transformer_layer.6} parent=15 // pred_check_branch
        %148 = sbr.rel (%p146) target = $region28
      $region27: #{transformer_layer.6} parent=15 // pred_region
        %p149 = scmp.lt.s32.totalorder %s9, 1
        %s150 = scalar_select %p149, %s9, 1
        %s151 = smul.addr %s150, 8
        %s152 = scalar_lea.vmem %s2, %s151
      $region28: #{transformer_layer.6} parent=15 // pred_fallthru
        _
    $region16: #{transformer_layer.6} parent=5 // pred_fallthru
      _
    %p153 = scmp.le.s32.totalorder 1, %s9
    %p154 = scmp.lt.s32.totalorder %s9, 3
    %p155 = pnand %p153, %p154
    %p156 = pneg %p155
    // Predicated region
    $region29: #{transformer_layer.6} parent=5 // pred_check
      _
    $region30: #{transformer_layer.6} parent=5 // pred_check_branch
      %158 = sbr.rel (%p155) target = $region32
    $region31: #{transformer_layer.6} parent=5 // pred_region
      %s159 = ssub.s32 %s9, 1
      %p160 = scmp.lt.s32.totalorder %s14, 1
      %s161 = scalar_select %p160, %s14, 1
      %s162 = smul.addr %s161, 8
      %s163 = scalar_lea.vmem %s0, %s162
      %p164 = pneg %p35
      %p165 = pneg %p32
      %p166 = scmp.lt.s32.totalorder %s14, 1
      %s167 = scalar_select %p166, %s14, 1
      %s168 = smul.addr %s167, 8
      %s169 = scalar_lea.vmem %s1, %s168
      %p170 = pneg %p61
      %p171 = pneg %p58
      %p172 = scmp.lt.s32.totalorder %s14, 1
      %s173 = scalar_select %p172, %s14, 1
      %s174 = smul.addr %s173, 8
      %s175 = scalar_lea.vmem %s2, %s174
      %p176 = pneg %p87
      %p177 = pneg %p84
      %p178 = pneg %p113
      %p179 = pneg %p110
      %p180 = scmp.lt.s32.totalorder %s14, 1
      %s181 = scalar_select %p180, %s14, 1
      %s182 = smul.addr %s181, 8
      %s183 = scalar_lea.vmem %s3, %s182
      %p184 = scmp.lt.s32.totalorder %s14, 1
      %s185 = scalar_select %p184, %s14, 1
      %s186 = smul.addr %s185, 8
      %s187 = scalar_lea.vmem %s0, %s186
      %p188 = scmp.lt.s32.totalorder %s14, 1
      %s189 = scalar_select %p188, %s14, 1
      %s190 = smul.addr %s189, 8
      %s191 = scalar_lea.vmem %s1, %s190
      %p192 = scmp.lt.s32.totalorder %s14, 1
      %s193 = scalar_select %p192, %s14, 1
      %s194 = smul.addr %s193, 8
      %s195 = scalar_lea.vmem %s2, %s194
      %p196 = scmp.lt.s32.totalorder %s14, 1
      %s197 = scalar_select %p196, %s14, 1
      %s198 = smul.addr %s197, 8
      %s199 = scalar_lea.vmem %s3, %s198
      %v200 = vld [vmem:[%s187] sm:$0xff]
      %v201 = vld [vmem:[%s191] sm:$0xff]
      %v202 = vld [vmem:[%s195] sm:$0xff]
      %vm203 = vcmask 64512
      %v205 = vsel %vm203, %v200, 0
      %v208 = vsel %vm203, %v201, 0
      %210 = vmatprep.subr.mxu0 0.0
      %211 = vmatpush1.xpose.msra.mxu0 0.0
      %212 = vmatprep.subr.mxu0 0.0
      %213 = vmatpush1.xpose.msra.mxu0 0.0
      %214 = vmatprep.subr.mxu0 0.0
      %215 = vmatpush1.xpose.msra.mxu0 0.0
      %216 = vmatprep.subr.mxu0 0.0
      %217 = vmatpush1.xpose.msra.mxu0 0.0
      %218 = vmatprep.subr.mxu0 0.0
      %219 = vmatpush1.xpose.msra.mxu0 0.0
      %220 = vmatprep.subr.mxu0 0.0
      %221 = vmatpush1.xpose.msra.mxu0 0.0
      %222 = vmatprep.subr.mxu0 0.0
      %223 = vmatpush1.xpose.msra.mxu0 0.0
      %224 = vmatprep.subr.mxu0 0.0
      %225 = vmatpush1.xpose.msra.mxu0 0.0
      %226 = vmatprep.subr.mxu0 0.0
      %227 = vmatpush1.xpose.msra.mxu0 0.0
      %228 = vmatprep.subr.mxu0 0.0
      %229 = vmatpush1.xpose.msra.mxu0 0.0
      %230 = vmatprep.subr.mxu0 0.0
      %231 = vmatpush1.xpose.msra.mxu0 0.0
      %232 = vmatprep.subr.mxu0 0.0
      %233 = vmatpush1.xpose.msra.mxu0 0.0
      %234 = vmatprep.subr.mxu0 0.0
      %235 = vmatpush1.xpose.msra.mxu0 0.0
      %236 = vmatprep.subr.mxu0 0.0
      %237 = vmatpush1.xpose.msra.mxu0 0.0
      %238 = vmatprep.subr.mxu0 0.0
      %239 = vmatpush1.xpose.msra.mxu0 0.0
      %240 = vmatprep.subr.mxu0 0.0
      %241 = vmatpush1.xpose.msra.mxu0 %v208
      %242 = vmatprep.subr.mxu0 0.0
      %243 = vmatpush2.xpose.msra.mxu0 0.0
      %244 = vmatprep.subr.mxu0 0.0
      %245 = vmatpush2.xpose.msra.mxu0 0.0
      %246 = vmatprep.subr.mxu0 0.0
      %247 = vmatpush2.xpose.msra.mxu0 0.0
      %248 = vmatprep.subr.mxu0 0.0
      %249 = vmatpush2.xpose.msra.mxu0 0.0
      %250 = vmatprep.subr.mxu0 0.0
      %251 = vmatpush2.xpose.msra.mxu0 0.0
      %252 = vmatprep.subr.mxu0 0.0
      %253 = vmatpush2.xpose.msra.mxu0 0.0
      %254 = vmatprep.subr.mxu0 0.0
      %255 = vmatpush2.xpose.msra.mxu0 0.0
      %256 = vmatprep.subr.mxu0 0.0
      %257 = vmatpush2.xpose.msra.mxu0 0.0
      %258 = vmatprep.subr.mxu0 0.0
      %259 = vmatpush2.xpose.msra.mxu0 0.0
      %260 = vmatprep.subr.mxu0 0.0
      %261 = vmatpush2.xpose.msra.mxu0 0.0
      %262 = vmatprep.subr.mxu0 0.0
      %263 = vmatpush2.xpose.msra.mxu0 0.0
      %264 = vmatprep.subr.mxu0 0.0
      %265 = vmatpush2.xpose.msra.mxu0 0.0
      %266 = vmatprep.subr.mxu0 0.0
      %267 = vmatpush2.xpose.msra.mxu0 0.0
      %268 = vmatprep.subr.mxu0 0.0
      %269 = vmatpush2.xpose.msra.mxu0 0.0
      %270 = vmatprep.subr.mxu0 0.0
      %271 = vmatpush2.xpose.msra.mxu0 0.0
      %272 = vmatprep.subr.mxu0 0.0
      %273 = vmatpush2.xpose.msra.mxu0 0.0
      %274 = vmatprep.mubr.f32.mxu0 0.0
      %275 = vmatmul.mubr.f32.gmra.mxu0 %v205
      %v276 = vpop.f32.mrf.mxu0
      %v277 = vadd.f32 0.0, %v276
      %v278 = vpop.f32.mrf.mxu0
      %279 = vdwg.mxu0
      %v280 = vsel %vm203, %v277, -inf
      %281 = vmax.xlane.f32.xlu0 %v280
      %v282 = vpop.xlane.xlu0 %281
      %v283 = vsub.f32 %v277, %v282
      %v284 = vmul.f32 %v283, 1.442695
      %v285 = vpow.pop %v284
      %v286 = vsel %vm203, %v285, 0.0
      %287 = vadd.xlane.f32.xlu0 %v286
      %v288 = vpop.xlane.xlu0 %287
      %v289 = vrcp.pop %v288
      %v290 = vmul.f32 %v285, %v289
      %v292 = vsel %vm203, %v290, 0
      %294 = vmatprep.subr.mxu0 0.0
      %295 = vmatpush1.msra.mxu0 0.0
      %296 = vmatprep.subr.mxu0 0.0
      %297 = vmatpush1.msra.mxu0 0.0
      %298 = vmatprep.subr.mxu0 0.0
      %299 = vmatpush1.msra.mxu0 0.0
      %300 = vmatprep.subr.mxu0 0.0
      %301 = vmatpush1.msra.mxu0 0.0
      %302 = vmatprep.subr.mxu0 0.0
      %303 = vmatpush1.msra.mxu0 0.0
      %304 = vmatprep.subr.mxu0 0.0
      %305 = vmatpush1.msra.mxu0 0.0
      %306 = vmatprep.subr.mxu0 0.0
      %307 = vmatpush1.msra.mxu0 0.0
      %308 = vmatprep.subr.mxu0 0.0
      %309 = vmatpush1.msra.mxu0 0.0
      %310 = vmatprep.subr.mxu0 0.0
      %311 = vmatpush1.msra.mxu0 0.0
      %312 = vmatprep.subr.mxu0 0.0
      %313 = vmatpush1.msra.mxu0 0.0
      %314 = vmatprep.subr.mxu0 0.0
      %315 = vmatpush1.msra.mxu0 0.0
      %316 = vmatprep.subr.mxu0 0.0
      %317 = vmatpush1.msra.mxu0 0.0
      %318 = vmatprep.subr.mxu0 0.0
      %319 = vmatpush1.msra.mxu0 0.0
      %320 = vmatprep.subr.mxu0 0.0
      %321 = vmatpush1.msra.mxu0 0.0
      %322 = vmatprep.subr.mxu0 0.0
      %323 = vmatpush1.msra.mxu0 0.0
      %324 = vmatprep.subr.mxu0 0.0
      %325 = vmatpush1.msra.mxu0 %v202
      %326 = vmatprep.subr.mxu0 0.0
      %327 = vmatpush2.msra.mxu0 0.0
      %328 = vmatprep.subr.mxu0 0.0
      %329 = vmatpush2.msra.mxu0 0.0
      %330 = vmatprep.subr.mxu0 0.0
      %331 = vmatpush2.msra.mxu0 0.0
      %332 = vmatprep.subr.mxu0 0.0
      %333 = vmatpush2.msra.mxu0 0.0
      %334 = vmatprep.subr.mxu0 0.0
      %335 = vmatpush2.msra.mxu0 0.0
      %336 = vmatprep.subr.mxu0 0.0
      %337 = vmatpush2.msra.mxu0 0.0
      %338 = vmatprep.subr.mxu0 0.0
      %339 = vmatpush2.msra.mxu0 0.0
      %340 = vmatprep.subr.mxu0 0.0
      %341 = vmatpush2.msra.mxu0 0.0
      %342 = vmatprep.subr.mxu0 0.0
      %343 = vmatpush2.msra.mxu0 0.0
      %344 = vmatprep.subr.mxu0 0.0
      %345 = vmatpush2.msra.mxu0 0.0
      %346 = vmatprep.subr.mxu0 0.0
      %347 = vmatpush2.msra.mxu0 0.0
      %348 = vmatprep.subr.mxu0 0.0
      %349 = vmatpush2.msra.mxu0 0.0
      %350 = vmatprep.subr.mxu0 0.0
      %351 = vmatpush2.msra.mxu0 0.0
      %352 = vmatprep.subr.mxu0 0.0
      %353 = vmatpush2.msra.mxu0 0.0
      %354 = vmatprep.subr.mxu0 0.0
      %355 = vmatpush2.msra.mxu0 0.0
      %356 = vmatprep.subr.mxu0 0.0
      %357 = vmatpush2.msra.mxu0 0.0
      %358 = vmatprep.mubr.f32.mxu0 0.0
      %359 = vmatmul.mubr.f32.gmra.mxu0 %v292
      %v360 = vpop.f32.mrf.mxu0
      %v361 = vadd.f32 0.0, %v360
      %v362 = vpop.f32.mrf.mxu0
      %363 = vdwg.mxu0
      %364 = vrot.lane.b32.xlu0 %v200, 120
      %v365 = vpop.permute.xlu0 %364
      %366 = vrot.lane.b32.xlu0 %v201, 120
      %v367 = vpop.permute.xlu0 %366
      %v368 = vsel %vm203, %v365, 0
      %v370 = vsel %vm203, %v367, 0
      %372 = vmatprep.subr.mxu0 0.0
      %373 = vmatpush1.xpose.msra.mxu0 0.0
      %374 = vmatprep.subr.mxu0 0.0
      %375 = vmatpush1.xpose.msra.mxu0 0.0
      %376 = vmatprep.subr.mxu0 0.0
      %377 = vmatpush1.xpose.msra.mxu0 0.0
      %378 = vmatprep.subr.mxu0 0.0
      %379 = vmatpush1.xpose.msra.mxu0 0.0
      %380 = vmatprep.subr.mxu0 0.0
      %381 = vmatpush1.xpose.msra.mxu0 0.0
      %382 = vmatprep.subr.mxu0 0.0
      %383 = vmatpush1.xpose.msra.mxu0 0.0
      %384 = vmatprep.subr.mxu0 0.0
      %385 = vmatpush1.xpose.msra.mxu0 0.0
      %386 = vmatprep.subr.mxu0 0.0
      %387 = vmatpush1.xpose.msra.mxu0 0.0
      %388 = vmatprep.subr.mxu0 0.0
      %389 = vmatpush1.xpose.msra.mxu0 0.0
      %390 = vmatprep.subr.mxu0 0.0
      %391 = vmatpush1.xpose.msra.mxu0 0.0
      %392 = vmatprep.subr.mxu0 0.0
      %393 = vmatpush1.xpose.msra.mxu0 0.0
      %394 = vmatprep.subr.mxu0 0.0
      %395 = vmatpush1.xpose.msra.mxu0 0.0
      %396 = vmatprep.subr.mxu0 0.0
      %397 = vmatpush1.xpose.msra.mxu0 0.0
      %398 = vmatprep.subr.mxu0 0.0
      %399 = vmatpush1.xpose.msra.mxu0 0.0
      %400 = vmatprep.subr.mxu0 0.0
      %401 = vmatpush1.xpose.msra.mxu0 0.0
      %402 = vmatprep.subr.mxu0 0.0
      %403 = vmatpush1.xpose.msra.mxu0 %v370
      %404 = vmatprep.subr.mxu0 0.0
      %405 = vmatpush2.xpose.msra.mxu0 0.0
      %406 = vmatprep.subr.mxu0 0.0
      %407 = vmatpush2.xpose.msra.mxu0 0.0
      %408 = vmatprep.subr.mxu0 0.0
      %409 = vmatpush2.xpose.msra.mxu0 0.0
      %410 = vmatprep.subr.mxu0 0.0
      %411 = vmatpush2.xpose.msra.mxu0 0.0
      %412 = vmatprep.subr.mxu0 0.0
      %413 = vmatpush2.xpose.msra.mxu0 0.0
      %414 = vmatprep.subr.mxu0 0.0
      %415 = vmatpush2.xpose.msra.mxu0 0.0
      %416 = vmatprep.subr.mxu0 0.0
      %417 = vmatpush2.xpose.msra.mxu0 0.0
      %418 = vmatprep.subr.mxu0 0.0
      %419 = vmatpush2.xpose.msra.mxu0 0.0
      %420 = vmatprep.subr.mxu0 0.0
      %421 = vmatpush2.xpose.msra.mxu0 0.0
      %422 = vmatprep.subr.mxu0 0.0
      %423 = vmatpush2.xpose.msra.mxu0 0.0
      %424 = vmatprep.subr.mxu0 0.0
      %425 = vmatpush2.xpose.msra.mxu0 0.0
      %426 = vmatprep.subr.mxu0 0.0
      %427 = vmatpush2.xpose.msra.mxu0 0.0
      %428 = vmatprep.subr.mxu0 0.0
      %429 = vmatpush2.xpose.msra.mxu0 0.0
      %430 = vmatprep.subr.mxu0 0.0
      %431 = vmatpush2.xpose.msra.mxu0 0.0
      %432 = vmatprep.subr.mxu0 0.0
      %433 = vmatpush2.xpose.msra.mxu0 0.0
      %434 = vmatprep.subr.mxu0 0.0
      %435 = vmatpush2.xpose.msra.mxu0 0.0
      %436 = vmatprep.mubr.f32.mxu0 0.0
      %437 = vmatmul.mubr.f32.gmra.mxu0 %v368
      %v438 = vpop.f32.mrf.mxu0
      %v439 = vadd.f32 0.0, %v438
      %v440 = vpop.f32.mrf.mxu0
      %441 = vdwg.mxu0
      %v442 = vsel %vm203, %v439, -inf
      %443 = vmax.xlane.f32.xlu0 %v442
      %v444 = vpop.xlane.xlu0 %443
      %v445 = vsub.f32 %v439, %v444
      %v446 = vmul.f32 %v445, 1.442695
      %v447 = vpow.pop %v446
      %v448 = vsel %vm203, %v447, 0.0
      %449 = vadd.xlane.f32.xlu0 %v448
      %v450 = vpop.xlane.xlu0 %449
      %v451 = vrcp.pop %v450
      %v452 = vmul.f32 %v447, %v451
      %454 = vrot.lane.b32.xlu0 %v202, 120
      %v455 = vpop.permute.xlu0 %454
      %v458 = vsel %vm203, %v452, 0
      %460 = vmatprep.subr.mxu0 0.0
      %461 = vmatpush1.msra.mxu0 0.0
      %462 = vmatprep.subr.mxu0 0.0
      %463 = vmatpush1.msra.mxu0 0.0
      %464 = vmatprep.subr.mxu0 0.0
      %465 = vmatpush1.msra.mxu0 0.0
      %466 = vmatprep.subr.mxu0 0.0
      %467 = vmatpush1.msra.mxu0 0.0
      %468 = vmatprep.subr.mxu0 0.0
      %469 = vmatpush1.msra.mxu0 0.0
      %470 = vmatprep.subr.mxu0 0.0
      %471 = vmatpush1.msra.mxu0 0.0
      %472 = vmatprep.subr.mxu0 0.0
      %473 = vmatpush1.msra.mxu0 0.0
      %474 = vmatprep.subr.mxu0 0.0
      %475 = vmatpush1.msra.mxu0 0.0
      %476 = vmatprep.subr.mxu0 0.0
      %477 = vmatpush1.msra.mxu0 0.0
      %478 = vmatprep.subr.mxu0 0.0
      %479 = vmatpush1.msra.mxu0 0.0
      %480 = vmatprep.subr.mxu0 0.0
      %481 = vmatpush1.msra.mxu0 0.0
      %482 = vmatprep.subr.mxu0 0.0
      %483 = vmatpush1.msra.mxu0 0.0
      %484 = vmatprep.subr.mxu0 0.0
      %485 = vmatpush1.msra.mxu0 0.0
      %486 = vmatprep.subr.mxu0 0.0
      %487 = vmatpush1.msra.mxu0 0.0
      %488 = vmatprep.subr.mxu0 0.0
      %489 = vmatpush1.msra.mxu0 0.0
      %490 = vmatprep.subr.mxu0 0.0
      %491 = vmatpush1.msra.mxu0 %v455
      %492 = vmatprep.subr.mxu0 0.0
      %493 = vmatpush2.msra.mxu0 0.0
      %494 = vmatprep.subr.mxu0 0.0
      %495 = vmatpush2.msra.mxu0 0.0
      %496 = vmatprep.subr.mxu0 0.0
      %497 = vmatpush2.msra.mxu0 0.0
      %498 = vmatprep.subr.mxu0 0.0
      %499 = vmatpush2.msra.mxu0 0.0
      %500 = vmatprep.subr.mxu0 0.0
      %501 = vmatpush2.msra.mxu0 0.0
      %502 = vmatprep.subr.mxu0 0.0
      %503 = vmatpush2.msra.mxu0 0.0
      %504 = vmatprep.subr.mxu0 0.0
      %505 = vmatpush2.msra.mxu0 0.0
      %506 = vmatprep.subr.mxu0 0.0
      %507 = vmatpush2.msra.mxu0 0.0
      %508 = vmatprep.subr.mxu0 0.0
      %509 = vmatpush2.msra.mxu0 0.0
      %510 = vmatprep.subr.mxu0 0.0
      %511 = vmatpush2.msra.mxu0 0.0
      %512 = vmatprep.subr.mxu0 0.0
      %513 = vmatpush2.msra.mxu0 0.0
      %514 = vmatprep.subr.mxu0 0.0
      %515 = vmatpush2.msra.mxu0 0.0
      %516 = vmatprep.subr.mxu0 0.0
      %517 = vmatpush2.msra.mxu0 0.0
      %518 = vmatprep.subr.mxu0 0.0
      %519 = vmatpush2.msra.mxu0 0.0
      %520 = vmatprep.subr.mxu0 0.0
      %521 = vmatpush2.msra.mxu0 0.0
      %522 = vmatprep.subr.mxu0 0.0
      %523 = vmatpush2.msra.mxu0 0.0
      %524 = vmatprep.mubr.f32.mxu0 0.0
      %525 = vmatmul.mubr.f32.gmra.mxu0 %v458
      %v526 = vpop.f32.mrf.mxu0
      %v527 = vadd.f32 0.0, %v526
      %v528 = vpop.f32.mrf.mxu0
      %529 = vdwg.mxu0
      %530 = vrot.lane.b32.xlu0 %v200, 112
      %v531 = vpop.permute.xlu0 %530
      %532 = vrot.lane.b32.xlu0 %v201, 112
      %v533 = vpop.permute.xlu0 %532
      %v534 = vsel %vm203, %v531, 0
      %v536 = vsel %vm203, %v533, 0
      %538 = vmatprep.subr.mxu0 0.0
      %539 = vmatpush1.xpose.msra.mxu0 0.0
      %540 = vmatprep.subr.mxu0 0.0
      %541 = vmatpush1.xpose.msra.mxu0 0.0
      %542 = vmatprep.subr.mxu0 0.0
      %543 = vmatpush1.xpose.msra.mxu0 0.0
      %544 = vmatprep.subr.mxu0 0.0
      %545 = vmatpush1.xpose.msra.mxu0 0.0
      %546 = vmatprep.subr.mxu0 0.0
      %547 = vmatpush1.xpose.msra.mxu0 0.0
      %548 = vmatprep.subr.mxu0 0.0
      %549 = vmatpush1.xpose.msra.mxu0 0.0
      %550 = vmatprep.subr.mxu0 0.0
      %551 = vmatpush1.xpose.msra.mxu0 0.0
      %552 = vmatprep.subr.mxu0 0.0
      %553 = vmatpush1.xpose.msra.mxu0 0.0
      %554 = vmatprep.subr.mxu0 0.0
      %555 = vmatpush1.xpose.msra.mxu0 0.0
      %556 = vmatprep.subr.mxu0 0.0
      %557 = vmatpush1.xpose.msra.mxu0 0.0
      %558 = vmatprep.subr.mxu0 0.0
      %559 = vmatpush1.xpose.msra.mxu0 0.0
      %560 = vmatprep.subr.mxu0 0.0
      %561 = vmatpush1.xpose.msra.mxu0 0.0
      %562 = vmatprep.subr.mxu0 0.0
      %563 = vmatpush1.xpose.msra.mxu0 0.0
      %564 = vmatprep.subr.mxu0 0.0
      %565 = vmatpush1.xpose.msra.mxu0 0.0
      %566 = vmatprep.subr.mxu0 0.0
      %567 = vmatpush1.xpose.msra.mxu0 0.0
      %568 = vmatprep.subr.mxu0 0.0
      %569 = vmatpush1.xpose.msra.mxu0 %v536
      %570 = vmatprep.subr.mxu0 0.0
      %571 = vmatpush2.xpose.msra.mxu0 0.0
      %572 = vmatprep.subr.mxu0 0.0
      %573 = vmatpush2.xpose.msra.mxu0 0.0
      %574 = vmatprep.subr.mxu0 0.0
      %575 = vmatpush2.xpose.msra.mxu0 0.0
      %576 = vmatprep.subr.mxu0 0.0
      %577 = vmatpush2.xpose.msra.mxu0 0.0
      %578 = vmatprep.subr.mxu0 0.0
      %579 = vmatpush2.xpose.msra.mxu0 0.0
      %580 = vmatprep.subr.mxu0 0.0
      %581 = vmatpush2.xpose.msra.mxu0 0.0
      %582 = vmatprep.subr.mxu0 0.0
      %583 = vmatpush2.xpose.msra.mxu0 0.0
      %584 = vmatprep.subr.mxu0 0.0
      %585 = vmatpush2.xpose.msra.mxu0 0.0
      %586 = vmatprep.subr.mxu0 0.0
      %587 = vmatpush2.xpose.msra.mxu0 0.0
      %588 = vmatprep.subr.mxu0 0.0
      %589 = vmatpush2.xpose.msra.mxu0 0.0
      %590 = vmatprep.subr.mxu0 0.0
      %591 = vmatpush2.xpose.msra.mxu0 0.0
      %592 = vmatprep.subr.mxu0 0.0
      %593 = vmatpush2.xpose.msra.mxu0 0.0
      %594 = vmatprep.subr.mxu0 0.0
      %595 = vmatpush2.xpose.msra.mxu0 0.0
      %596 = vmatprep.subr.mxu0 0.0
      %597 = vmatpush2.xpose.msra.mxu0 0.0
      %598 = vmatprep.subr.mxu0 0.0
      %599 = vmatpush2.xpose.msra.mxu0 0.0
      %600 = vmatprep.subr.mxu0 0.0
      %601 = vmatpush2.xpose.msra.mxu0 0.0
      %602 = vmatprep.mubr.f32.mxu0 0.0
      %603 = vmatmul.mubr.f32.gmra.mxu0 %v534
      %v604 = vpop.f32.mrf.mxu0
      %v605 = vadd.f32 0.0, %v604
      %v606 = vpop.f32.mrf.mxu0
      %607 = vdwg.mxu0
      %v608 = vsel %vm203, %v605, -inf
      %609 = vmax.xlane.f32.xlu0 %v608
      %v610 = vpop.xlane.xlu0 %609
      %v611 = vsub.f32 %v605, %v610
      %v612 = vmul.f32 %v611, 1.442695
      %v613 = vpow.pop %v612
      %v614 = vsel %vm203, %v613, 0.0
      %615 = vadd.xlane.f32.xlu0 %v614
      %v616 = vpop.xlane.xlu0 %615
      %v617 = vrcp.pop %v616
      %v618 = vmul.f32 %v613, %v617
      %619 = vrot.lane.b32.xlu0 %v202, 112
      %v620 = vpop.permute.xlu0 %619
      %v623 = vsel %vm203, %v618, 0
      %625 = vmatprep.subr.mxu0 0.0
      %626 = vmatpush1.msra.mxu0 0.0
      %627 = vmatprep.subr.mxu0 0.0
      %628 = vmatpush1.msra.mxu0 0.0
      %629 = vmatprep.subr.mxu0 0.0
      %630 = vmatpush1.msra.mxu0 0.0
      %631 = vmatprep.subr.mxu0 0.0
      %632 = vmatpush1.msra.mxu0 0.0
      %633 = vmatprep.subr.mxu0 0.0
      %634 = vmatpush1.msra.mxu0 0.0
      %635 = vmatprep.subr.mxu0 0.0
      %636 = vmatpush1.msra.mxu0 0.0
      %637 = vmatprep.subr.mxu0 0.0
      %638 = vmatpush1.msra.mxu0 0.0
      %639 = vmatprep.subr.mxu0 0.0
      %640 = vmatpush1.msra.mxu0 0.0
      %641 = vmatprep.subr.mxu0 0.0
      %642 = vmatpush1.msra.mxu0 0.0
      %643 = vmatprep.subr.mxu0 0.0
      %644 = vmatpush1.msra.mxu0 0.0
      %645 = vmatprep.subr.mxu0 0.0
      %646 = vmatpush1.msra.mxu0 0.0
      %647 = vmatprep.subr.mxu0 0.0
      %648 = vmatpush1.msra.mxu0 0.0
      %649 = vmatprep.subr.mxu0 0.0
      %650 = vmatpush1.msra.mxu0 0.0
      %651 = vmatprep.subr.mxu0 0.0
      %652 = vmatpush1.msra.mxu0 0.0
      %653 = vmatprep.subr.mxu0 0.0
      %654 = vmatpush1.msra.mxu0 0.0
      %655 = vmatprep.subr.mxu0 0.0
      %656 = vmatpush1.msra.mxu0 %v620
      %657 = vmatprep.subr.mxu0 0.0
      %658 = vmatpush2.msra.mxu0 0.0
      %659 = vmatprep.subr.mxu0 0.0
      %660 = vmatpush2.msra.mxu0 0.0
      %661 = vmatprep.subr.mxu0 0.0
      %662 = vmatpush2.msra.mxu0 0.0
      %663 = vmatprep.subr.mxu0 0.0
      %664 = vmatpush2.msra.mxu0 0.0
      %665 = vmatprep.subr.mxu0 0.0
      %666 = vmatpush2.msra.mxu0 0.0
      %667 = vmatprep.subr.mxu0 0.0
      %668 = vmatpush2.msra.mxu0 0.0
      %669 = vmatprep.subr.mxu0 0.0
      %670 = vmatpush2.msra.mxu0 0.0
      %671 = vmatprep.subr.mxu0 0.0
      %672 = vmatpush2.msra.mxu0 0.0
      %673 = vmatprep.subr.mxu0 0.0
      %674 = vmatpush2.msra.mxu0 0.0
      %675 = vmatprep.subr.mxu0 0.0
      %676 = vmatpush2.msra.mxu0 0.0
      %677 = vmatprep.subr.mxu0 0.0
      %678 = vmatpush2.msra.mxu0 0.0
      %679 = vmatprep.subr.mxu0 0.0
      %680 = vmatpush2.msra.mxu0 0.0
      %681 = vmatprep.subr.mxu0 0.0
      %682 = vmatpush2.msra.mxu0 0.0
      %683 = vmatprep.subr.mxu0 0.0
      %684 = vmatpush2.msra.mxu0 0.0
      %685 = vmatprep.subr.mxu0 0.0
      %686 = vmatpush2.msra.mxu0 0.0
      %687 = vmatprep.subr.mxu0 0.0
      %688 = vmatpush2.msra.mxu0 0.0
      %689 = vmatprep.mubr.f32.mxu0 0.0
      %690 = vmatmul.mubr.f32.gmra.mxu0 %v623
      %v691 = vpop.f32.mrf.mxu0
      %v692 = vadd.f32 0.0, %v691
      %v693 = vpop.f32.mrf.mxu0
      %694 = vdwg.mxu0
      %695 = vrot.lane.b32.xlu0 %v200, 104
      %v696 = vpop.permute.xlu0 %695
      %697 = vrot.lane.b32.xlu0 %v201, 104
      %v698 = vpop.permute.xlu0 %697
      %v699 = vsel %vm203, %v696, 0
      %v701 = vsel %vm203, %v698, 0
      %703 = vmatprep.subr.mxu0 0.0
      %704 = vmatpush1.xpose.msra.mxu0 0.0
      %705 = vmatprep.subr.mxu0 0.0
      %706 = vmatpush1.xpose.msra.mxu0 0.0
      %707 = vmatprep.subr.mxu0 0.0
      %708 = vmatpush1.xpose.msra.mxu0 0.0
      %709 = vmatprep.subr.mxu0 0.0
      %710 = vmatpush1.xpose.msra.mxu0 0.0
      %711 = vmatprep.subr.mxu0 0.0
      %712 = vmatpush1.xpose.msra.mxu0 0.0
      %713 = vmatprep.subr.mxu0 0.0
      %714 = vmatpush1.xpose.msra.mxu0 0.0
      %715 = vmatprep.subr.mxu0 0.0
      %716 = vmatpush1.xpose.msra.mxu0 0.0
      %717 = vmatprep.subr.mxu0 0.0
      %718 = vmatpush1.xpose.msra.mxu0 0.0
      %719 = vmatprep.subr.mxu0 0.0
      %720 = vmatpush1.xpose.msra.mxu0 0.0
      %721 = vmatprep.subr.mxu0 0.0
      %722 = vmatpush1.xpose.msra.mxu0 0.0
      %723 = vmatprep.subr.mxu0 0.0
      %724 = vmatpush1.xpose.msra.mxu0 0.0
      %725 = vmatprep.subr.mxu0 0.0
      %726 = vmatpush1.xpose.msra.mxu0 0.0
      %727 = vmatprep.subr.mxu0 0.0
      %728 = vmatpush1.xpose.msra.mxu0 0.0
      %729 = vmatprep.subr.mxu0 0.0
      %730 = vmatpush1.xpose.msra.mxu0 0.0
      %731 = vmatprep.subr.mxu0 0.0
      %732 = vmatpush1.xpose.msra.mxu0 0.0
      %733 = vmatprep.subr.mxu0 0.0
      %734 = vmatpush1.xpose.msra.mxu0 %v701
      %735 = vmatprep.subr.mxu0 0.0
      %736 = vmatpush2.xpose.msra.mxu0 0.0
      %737 = vmatprep.subr.mxu0 0.0
      %738 = vmatpush2.xpose.msra.mxu0 0.0
      %739 = vmatprep.subr.mxu0 0.0
      %740 = vmatpush2.xpose.msra.mxu0 0.0
      %741 = vmatprep.subr.mxu0 0.0
      %742 = vmatpush2.xpose.msra.mxu0 0.0
      %743 = vmatprep.subr.mxu0 0.0
      %744 = vmatpush2.xpose.msra.mxu0 0.0
      %745 = vmatprep.subr.mxu0 0.0
      %746 = vmatpush2.xpose.msra.mxu0 0.0
      %747 = vmatprep.subr.mxu0 0.0
      %748 = vmatpush2.xpose.msra.mxu0 0.0
      %749 = vmatprep.subr.mxu0 0.0
      %750 = vmatpush2.xpose.msra.mxu0 0.0
      %751 = vmatprep.subr.mxu0 0.0
      %752 = vmatpush2.xpose.msra.mxu0 0.0
      %753 = vmatprep.subr.mxu0 0.0
      %754 = vmatpush2.xpose.msra.mxu0 0.0
      %755 = vmatprep.subr.mxu0 0.0
      %756 = vmatpush2.xpose.msra.mxu0 0.0
      %757 = vmatprep.subr.mxu0 0.0
      %758 = vmatpush2.xpose.msra.mxu0 0.0
      %759 = vmatprep.subr.mxu0 0.0
      %760 = vmatpush2.xpose.msra.mxu0 0.0
      %761 = vmatprep.subr.mxu0 0.0
      %762 = vmatpush2.xpose.msra.mxu0 0.0
      %763 = vmatprep.subr.mxu0 0.0
      %764 = vmatpush2.xpose.msra.mxu0 0.0
      %765 = vmatprep.subr.mxu0 0.0
      %766 = vmatpush2.xpose.msra.mxu0 0.0
      %767 = vmatprep.mubr.f32.mxu0 0.0
      %768 = vmatmul.mubr.f32.gmra.mxu0 %v699
      %v769 = vpop.f32.mrf.mxu0
      %v770 = vadd.f32 0.0, %v769
      %v771 = vpop.f32.mrf.mxu0
      %772 = vdwg.mxu0
      %v773 = vsel %vm203, %v770, -inf
      %774 = vmax.xlane.f32.xlu0 %v773
      %v775 = vpop.xlane.xlu0 %774
      %v776 = vsub.f32 %v770, %v775
      %v777 = vmul.f32 %v776, 1.442695
      %v778 = vpow.pop %v777
      %v779 = vsel %vm203, %v778, 0.0
      %780 = vadd.xlane.f32.xlu0 %v779
      %v781 = vpop.xlane.xlu0 %780
      %v782 = vrcp.pop %v781
      %v783 = vmul.f32 %v778, %v782
      %784 = vrot.lane.b32.xlu0 %v202, 104
      %v785 = vpop.permute.xlu0 %784
      %v788 = vsel %vm203, %v783, 0
      %790 = vmatprep.subr.mxu0 0.0
      %791 = vmatpush1.msra.mxu0 0.0
      %792 = vmatprep.subr.mxu0 0.0
      %793 = vmatpush1.msra.mxu0 0.0
      %794 = vmatprep.subr.mxu0 0.0
      %795 = vmatpush1.msra.mxu0 0.0
      %796 = vmatprep.subr.mxu0 0.0
      %797 = vmatpush1.msra.mxu0 0.0
      %798 = vmatprep.subr.mxu0 0.0
      %799 = vmatpush1.msra.mxu0 0.0
      %800 = vmatprep.subr.mxu0 0.0
      %801 = vmatpush1.msra.mxu0 0.0
      %802 = vmatprep.subr.mxu0 0.0
      %803 = vmatpush1.msra.mxu0 0.0
      %804 = vmatprep.subr.mxu0 0.0
      %805 = vmatpush1.msra.mxu0 0.0
      %806 = vmatprep.subr.mxu0 0.0
      %807 = vmatpush1.msra.mxu0 0.0
      %808 = vmatprep.subr.mxu0 0.0
      %809 = vmatpush1.msra.mxu0 0.0
      %810 = vmatprep.subr.mxu0 0.0
      %811 = vmatpush1.msra.mxu0 0.0
      %812 = vmatprep.subr.mxu0 0.0
      %813 = vmatpush1.msra.mxu0 0.0
      %814 = vmatprep.subr.mxu0 0.0
      %815 = vmatpush1.msra.mxu0 0.0
      %816 = vmatprep.subr.mxu0 0.0
      %817 = vmatpush1.msra.mxu0 0.0
      %818 = vmatprep.subr.mxu0 0.0
      %819 = vmatpush1.msra.mxu0 0.0
      %820 = vmatprep.subr.mxu0 0.0
      %821 = vmatpush1.msra.mxu0 %v785
      %822 = vmatprep.subr.mxu0 0.0
      %823 = vmatpush2.msra.mxu0 0.0
      %824 = vmatprep.subr.mxu0 0.0
      %825 = vmatpush2.msra.mxu0 0.0
      %826 = vmatprep.subr.mxu0 0.0
      %827 = vmatpush2.msra.mxu0 0.0
      %828 = vmatprep.subr.mxu0 0.0
      %829 = vmatpush2.msra.mxu0 0.0
      %830 = vmatprep.subr.mxu0 0.0
      %831 = vmatpush2.msra.mxu0 0.0
      %832 = vmatprep.subr.mxu0 0.0
      %833 = vmatpush2.msra.mxu0 0.0
      %834 = vmatprep.subr.mxu0 0.0
      %835 = vmatpush2.msra.mxu0 0.0
      %836 = vmatprep.subr.mxu0 0.0
      %837 = vmatpush2.msra.mxu0 0.0
      %838 = vmatprep.subr.mxu0 0.0
      %839 = vmatpush2.msra.mxu0 0.0
      %840 = vmatprep.subr.mxu0 0.0
      %841 = vmatpush2.msra.mxu0 0.0
      %842 = vmatprep.subr.mxu0 0.0
      %843 = vmatpush2.msra.mxu0 0.0
      %844 = vmatprep.subr.mxu0 0.0
      %845 = vmatpush2.msra.mxu0 0.0
      %846 = vmatprep.subr.mxu0 0.0
      %847 = vmatpush2.msra.mxu0 0.0
      %848 = vmatprep.subr.mxu0 0.0
      %849 = vmatpush2.msra.mxu0 0.0
      %850 = vmatprep.subr.mxu0 0.0
      %851 = vmatpush2.msra.mxu0 0.0
      %852 = vmatprep.subr.mxu0 0.0
      %853 = vmatpush2.msra.mxu0 0.0
      %854 = vmatprep.mubr.f32.mxu0 0.0
      %855 = vmatmul.mubr.f32.gmra.mxu0 %v788
      %v856 = vpop.f32.mrf.mxu0
      %v857 = vadd.f32 0.0, %v856
      %v858 = vpop.f32.mrf.mxu0
      %859 = vdwg.mxu0
      %861 = vrot.lane.b32.xlu0 %v527, 8
      %v862 = vpop.permute.xlu0 %861
      %865 = vrot.lane.b32.xlu0 %v692, 16
      %v866 = vpop.permute.xlu0 %865
      %869 = vrot.lane.b32.xlu0 %v857, 24
      %v870 = vpop.permute.xlu0 %869
      %v872 = vsel %vm203, %v361, %v862
      %vm873 = vcmask 130048
      %v874 = vsel %vm873, %v872, %v866
      %vm875 = vcmask 195584
      %v876 = vsel %vm875, %v874, %v870
      %vm877 = vcmask 261120
      %878 = vst.msk [vmem:[%s199] sm:$0xff] %vm877, %v876
      %p879 = scmp.lt.s32.totalorder %s14, 1
      %s880 = scalar_select %p879, %s14, 1
      %s881 = smul.addr %s880, 8
      %s882 = scalar_lea.vmem %s3, %s881
      // Predicated region
      $region33: #{transformer_layer.6} parent=31 // pred_check
        %p883 = pneg %p110
      $region34: #{transformer_layer.6} parent=31 // pred_check_branch
        %885 = sbr.rel (%p883) target = $region36
      $region35: #{transformer_layer.6} parent=31 // pred_region
        _
      $region36: #{transformer_layer.6} parent=31 // pred_fallthru
        _
    $region32: #{transformer_layer.6} parent=5 // pred_fallthru
      _
    %p886 = scmp.le.s32.totalorder 2, %s9
    // Predicated region
    $region37: #{transformer_layer.6} parent=5 // pred_check
      %p887 = pneg %p886
    $region38: #{transformer_layer.6} parent=5 // pred_check_branch
      %889 = sbr.rel (%p887) target = $region40
    $region39: #{transformer_layer.6} parent=5 // pred_region
      %s890 = ssub.s32 %s9, 2
      // Predicated region
      $region41: #{transformer_layer.6} parent=39 // pred_check
        %p891 = pneg %p116
      $region42: #{transformer_layer.6} parent=39 // pred_check_branch
        %893 = sbr.rel (%p891) target = $region44
      $region43: #{transformer_layer.6} parent=39 // pred_region
        %p894 = scmp.lt.s32.totalorder %s15, 1
        %s895 = scalar_select %p894, %s15, 1
        %s896 = smul.addr %s895, 8
        %s897 = scalar_lea.vmem %s3, %s896
      $region44: #{transformer_layer.6} parent=39 // pred_fallthru
        _
    $region40: #{transformer_layer.6} parent=5 // pred_fallthru
      _
  $region6: #{transformer_layer.6} parent=0 // loop_footer
    %s13 = sadd.s32 1, %s9
  $region7: #{transformer_layer.6} parent=0 // loop_footer_branch
    %8 = sbr.rel target = $region3
  $region8: #{transformer_layer.6} parent=0 // loop_exit
    _

// kernel: transformer_layer.9
$region0: #{transformer_layer.9}
  #allocation0 [shape = 'u32[]', space=smem, size = 0x4, offset = 0x4, fixed_abs, tag = 'smem constant byte address 0x4 - core index']
  #allocation1 [shape = 'u32[144,128]{1,0:T(1,128)}', space=vmem, size = 0x12000, scoped, tag = 'internal scratch']
  #allocation2 [shape = 'f32[16,32]{1,0:T(8,128)}', space=vmem, size = 0x2000, scoped, tag = 'scratch operand']
  %s0 = inlined_call_operand.vmem [shape: f32[16,32], index: 0, kind: input, shape index: {}]
  %s1 = inlined_call_operand.vmem [shape: f32[32,32], index: 1, kind: input, shape index: {}]
  %s2 = inlined_call_operand.vmem [shape: f32[16,32], index: 2, kind: input, shape index: {}]
  %s3 = inlined_call_operand.vmem [shape: f32[16,32], index: 3, kind: output, shape index: {}]
  %s4 = sld [smem:[#allocation0]]
  $region30: #{transformer_layer.9} parent=0
    _
  %s6 = ssub.s32 1, %s4
  %s7 = scalar_select 0, %s6, %s4
  // Predicated region
  $region2: #{transformer_layer.9} parent=0 // pred_check
    _
  $region3: #{transformer_layer.9} parent=0 // pred_check_branch
    %9 = sbr.rel (0) target = $region5
  $region4: #{transformer_layer.9} parent=0 // pred_region
    _
  $region5: #{transformer_layer.9} parent=0 // pred_fallthru
    _
  // Predicated region
  $region6: #{transformer_layer.9} parent=0 // pred_check
    _
  $region7: #{transformer_layer.9} parent=0 // pred_check_branch
    %11 = sbr.rel (0) target = $region9
  $region8: #{transformer_layer.9} parent=0 // pred_region
    _
  $region9: #{transformer_layer.9} parent=0 // pred_fallthru
    _
  // Predicated region
  $region10: #{transformer_layer.9} parent=0 // pred_check
    _
  $region11: #{transformer_layer.9} parent=0 // pred_check_branch
    %13 = sbr.rel (0) target = $region13
  $region12: #{transformer_layer.9} parent=0 // pred_region
    _
  $region13: #{transformer_layer.9} parent=0 // pred_fallthru
    _
  %p14 = scmp.eq.s32.totalorder 0, 0
  // Predicated region
  $region14: #{transformer_layer.9} parent=0 // pred_check
    %p15 = pneg %p14
  $region15: #{transformer_layer.9} parent=0 // pred_check_branch
    %17 = sbr.rel (%p15) target = $region17
  $region16: #{transformer_layer.9} parent=0 // pred_region
    %vm18 = vcmask 261120
    %19 = vst.msk [vmem:[#allocation2] sm:$0xff] %vm18, 0.0
    %20 = vst.msk [vmem:[#allocation2 + $0x8] sm:$0xff] %vm18, 0.0
  $region17: #{transformer_layer.9} parent=0 // pred_fallthru
    _
  %v21 = vld [vmem:[#allocation2] sm:$0xff]
  %v22 = vld [vmem:[#allocation2 + $0x8] sm:$0xff]
  %v23 = vld [vmem:[%s0] sm:$0xff]
  %v24 = vld [vmem:[%s0 + $0x8] sm:$0xff]
  %v25 = vld [vmem:[%s1] sm:$0xff]
  %v26 = vld [vmem:[%s1 + $0x8] sm:$0xff]
  %v27 = vld [vmem:[%s1 + $0x10] sm:$0xff]
  %v28 = vld [vmem:[%s1 + $0x18] sm:$0xff]
  %vm29 = vcmask 261120
  %v31 = vsel %vm29, %v23, 0
  %v34 = vsel %vm29, %v24, 0
  %36 = vmatprep.subr.mxu0 0.0
  %37 = vmatpush1.msra.mxu0 0.0
  %38 = vmatprep.subr.mxu0 0.0
  %39 = vmatpush1.msra.mxu0 0.0
  %40 = vmatprep.subr.mxu0 0.0
  %41 = vmatpush1.msra.mxu0 0.0
  %42 = vmatprep.subr.mxu0 0.0
  %43 = vmatpush1.msra.mxu0 0.0
  %44 = vmatprep.subr.mxu0 0.0
  %45 = vmatpush1.msra.mxu0 0.0
  %46 = vmatprep.subr.mxu0 0.0
  %47 = vmatpush1.msra.mxu0 0.0
  %48 = vmatprep.subr.mxu0 0.0
  %49 = vmatpush1.msra.mxu0 0.0
  %50 = vmatprep.subr.mxu0 0.0
  %51 = vmatpush1.msra.mxu0 0.0
  %52 = vmatprep.subr.mxu0 0.0
  %53 = vmatpush1.msra.mxu0 0.0
  %54 = vmatprep.subr.mxu0 0.0
  %55 = vmatpush1.msra.mxu0 0.0
  %56 = vmatprep.subr.mxu0 0.0
  %57 = vmatpush1.msra.mxu0 0.0
  %58 = vmatprep.subr.mxu0 0.0
  %59 = vmatpush1.msra.mxu0 0.0
  %60 = vmatprep.subr.mxu0 0.0
  %61 = vmatpush1.msra.mxu0 %v28
  %62 = vmatprep.subr.mxu0 0.0
  %63 = vmatpush1.msra.mxu0 %v27
  %64 = vmatprep.subr.mxu0 0.0
  %65 = vmatpush1.msra.mxu0 %v26
  %66 = vmatprep.subr.mxu0 0.0
  %67 = vmatpush1.msra.mxu0 %v25
  %68 = vmatprep.subr.mxu0 0.0
  %69 = vmatpush2.msra.mxu0 0.0
  %70 = vmatprep.subr.mxu0 0.0
  %71 = vmatpush2.msra.mxu0 0.0
  %72 = vmatprep.subr.mxu0 0.0
  %73 = vmatpush2.msra.mxu0 0.0
  %74 = vmatprep.subr.mxu0 0.0
  %75 = vmatpush2.msra.mxu0 0.0
  %76 = vmatprep.subr.mxu0 0.0
  %77 = vmatpush2.msra.mxu0 0.0
  %78 = vmatprep.subr.mxu0 0.0
  %79 = vmatpush2.msra.mxu0 0.0
  %80 = vmatprep.subr.mxu0 0.0
  %81 = vmatpush2.msra.mxu0 0.0
  %82 = vmatprep.subr.mxu0 0.0
  %83 = vmatpush2.msra.mxu0 0.0
  %84 = vmatprep.subr.mxu0 0.0
  %85 = vmatpush2.msra.mxu0 0.0
  %86 = vmatprep.subr.mxu0 0.0
  %87 = vmatpush2.msra.mxu0 0.0
  %88 = vmatprep.subr.mxu0 0.0
  %89 = vmatpush2.msra.mxu0 0.0
  %90 = vmatprep.subr.mxu0 0.0
  %91 = vmatpush2.msra.mxu0 0.0
  %92 = vmatprep.subr.mxu0 0.0
  %93 = vmatpush2.msra.mxu0 0.0
  %94 = vmatprep.subr.mxu0 0.0
  %95 = vmatpush2.msra.mxu0 0.0
  %96 = vmatprep.subr.mxu0 0.0
  %97 = vmatpush2.msra.mxu0 0.0
  %98 = vmatprep.subr.mxu0 0.0
  %99 = vmatpush2.msra.mxu0 0.0
  %100 = vmatprep.mubr.f32.mxu0 0.0
  %101 = vmatmul.mubr.f32.gmra.mxu0 %v31
  %v102 = vpop.f32.mrf.mxu0
  %v103 = vadd.f32 0.0, %v102
  %v104 = vpop.f32.mrf.mxu0
  %105 = vmatprep.mubr.f32.mxu0 0.0
  %106 = vmatmul.mubr.f32.gmra.mxu0 %v34
  %v107 = vpop.f32.mrf.mxu0
  %v108 = vadd.f32 0.0, %v107
  %v109 = vpop.f32.mrf.mxu0
  %110 = vdwg.mxu0
  %v111 = vadd.f32 %v21, %v103
  %v112 = vadd.f32 %v22, %v108
  %113 = vst.msk [vmem:[#allocation2] sm:$0xff] %vm29, %v111
  %114 = vst.msk [vmem:[#allocation2 + $0x8] sm:$0xff] %vm29, %v112
  // Predicated region
  $region18: #{transformer_layer.9} parent=0 // pred_check
    %p115 = pneg %p14
  $region19: #{transformer_layer.9} parent=0 // pred_check_branch
    %117 = sbr.rel (%p115) target = $region21
  $region20: #{transformer_layer.9} parent=0 // pred_region
    %v118 = vld [vmem:[#allocation2] sm:$0xff]
    %v119 = vld [vmem:[#allocation2 + $0x8] sm:$0xff]
    %v120 = vld [vmem:[%s2] sm:$0xff]
    %v121 = vld [vmem:[%s2 + $0x8] sm:$0xff]
    %v122 = vadd.f32 %v118, %v120
    %v123 = vadd.f32 %v119, %v121
    %124 = vst.msk [vmem:[%s3] sm:$0xff] %vm29, %v122
    %125 = vst.msk [vmem:[%s3 + $0x8] sm:$0xff] %vm29, %v123
  $region21: #{transformer_layer.9} parent=0 // pred_fallthru
    _
  // Predicated region
  $region22: #{transformer_layer.9} parent=0 // pred_check
    _
  $region23: #{transformer_layer.9} parent=0 // pred_check_branch
    %127 = sbr.rel (0) target = $region25
  $region24: #{transformer_layer.9} parent=0 // pred_region
    _
  $region25: #{transformer_layer.9} parent=0 // pred_fallthru
    _
  // Predicated region
  $region26: #{transformer_layer.9} parent=0 // pred_check
    _
  $region27: #{transformer_layer.9} parent=0 // pred_check_branch
    %129 = sbr.rel (0) target = $region29
  $region28: #{transformer_layer.9} parent=0 // pred_region
    _
  $region29: #{transformer_layer.9} parent=0 // pred_fallthru
    _

</llo_original>
